<compile_context>
chip_gen: v5e
topology: v5e:2x2
jax: 0.10.0
libtpu: 0.0.40
codegen_flags: <defaults>
</compile_context>

<pallas_src>
import functools
import jax
import jax.numpy as jnp
from jax import lax
from jax.experimental import pallas as pl
from jax.experimental.pallas import tpu as pltpu

# ---- small, self-consistent config (same structure as GPTConfig, small dims) ----
N_EMBD = 64
N_HEAD = 4
HEAD_DIM = N_EMBD // N_HEAD
LN_EPS = 1e-5
LANE = 128

# Native MXU input dtype on v5e / v6e / v7x.  Accumulation stays f32
# (preferred_element_type) and all elementwise math stays f32.
MXU_DTYPE = jnp.bfloat16


def _mm(a, w):
    """MXU matmul: bf16 operands, f32 accumulation."""
    return jnp.dot(a.astype(MXU_DTYPE), w.astype(MXU_DTYPE),
                   preferred_element_type=jnp.float32)


def _layernorm(x, g, b):
    mu = jnp.mean(x, axis=-1, keepdims=True)
    var = jnp.mean((x - mu) ** 2, axis=-1, keepdims=True)
    return (x - mu) * lax.rsqrt(var + LN_EPS) * g + b


def _gelu_tanh(x):
    # matches nn.GELU(approximate='tanh')
    c = 0.7978845608028654  # sqrt(2/pi)
    return 0.5 * x * (1.0 + jnp.tanh(c * (x + 0.044715 * x * x * x)))


def block_kernel(x_ref,
                 ln1g_ref, ln1b_ref,
                 wqkv_ref, bqkv_ref, wo_ref, bo_ref,
                 ln2g_ref, ln2b_ref,
                 wfc_ref, bfc_ref, wpr_ref, bpr_ref,
                 o_ref, *, n_head):
    # One batch element per grid step (grid axis over B, "parallel").
    x = x_ref[0].astype(jnp.float32)            # (T, C)
    T, C = x.shape
    D = C // n_head

    # ---------------- attention branch:  x + attn(ln_1(x)) ----------------
    h = _layernorm(x, ln1g_ref[...], ln1b_ref[...])

    # fused QKV (one (T,C)x(C,3C) matmul); 1/sqrt(D) already folded into the
    # q columns of wqkv / bqkv at init time -> no in-kernel scale multiply.
    qkv = _mm(h, wqkv_ref[...]) + bqkv_ref[...]          # (T, 3C), f32

    q = qkv[:, 0:C]
    k = qkv[:, C:2 * C]
    v = qkv[:, 2 * C:3 * C]

    # head split: single reshape + swapaxes per tensor (no per-head slice loop)
    qh = jnp.swapaxes(q.reshape(T, n_head, D), 0, 1)     # (H, T, D)
    kh = jnp.swapaxes(k.reshape(T, n_head, D), 0, 1)
    vh = jnp.swapaxes(v.reshape(T, n_head, D), 0, 1)

    # per-batch scores -> plain causal triangle mask, no cross-batch waste
    s = jnp.einsum('htd,hsd->hts',
                   qh.astype(MXU_DTYPE), kh.astype(MXU_DTYPE),
                   preferred_element_type=jnp.float32)    # (H, T, T), f32

    rows = lax.broadcasted_iota(jnp.int32, (T, T), 0)
    cols = lax.broadcasted_iota(jnp.int32, (T, T), 1)
    s = jnp.where((cols <= rows)[None, :, :], s, jnp.float32(-1e30))

    s = s - jnp.max(s, axis=-1, keepdims=True)
    p = jnp.exp(s)
    denom = jnp.sum(p, axis=-1, keepdims=True)
    # EUP reciprocal (off the VALU path); ~1e-3 rel error, covered by tolerance.
    p = p * pl.reciprocal(denom, approx=True)

    y = jnp.einsum('hts,hsd->htd',
                   p.astype(MXU_DTYPE), vh.astype(MXU_DTYPE),
                   preferred_element_type=jnp.float32)    # (H, T, D)
    y = jnp.swapaxes(y, 0, 1).reshape(T, C)               # (T, C)

    x = x + _mm(y, wo_ref[...]) + bo_ref[...]

    # ---------------- MLP branch:  x + mlp(ln_2(x)) ----------------
    h2 = _layernorm(x, ln2g_ref[...], ln2b_ref[...])
    f = _mm(h2, wfc_ref[...]) + bfc_ref[...]              # (T, 4C) -> 256 lanes dense
    f = _gelu_tanh(f)
    x = x + _mm(f, wpr_ref[...]) + bpr_ref[...]

    # lane-dense store: pad the 64-lane result to a 128-lane slab so the
    # epilogue is unmasked vst (wrapper slices the pad off).  At real GPT-2
    # dims (C=768) the pad is a no-op.
    c_pad = o_ref.shape[-1]
    if c_pad > C:
        x = jnp.concatenate(
            [x, jnp.zeros((T, c_pad - C), jnp.float32)], axis=-1)
    o_ref[0] = x.astype(o_ref.dtype)


def pack_params(p):
    """One-time packing into kernel layout (hoisted out of the forward pass):
    fused QKV weight/bias with 1/sqrt(D) folded into the q columns, and
    matmul weights pre-cast to the MXU input dtype."""
    scale = 1.0 / (HEAD_DIM ** 0.5)
    wqkv = jnp.concatenate([p["wq"] * scale, p["wk"], p["wv"]], axis=1)  # (C, 3C)
    bqkv = jnp.concatenate([p["bq"] * scale, p["bk"], p["bv"]], axis=1)  # (1, 3C)
    return {
        "ln1_g": p["ln1_g"], "ln1_b": p["ln1_b"],
        "wqkv": wqkv.astype(MXU_DTYPE), "bqkv": bqkv,
        "wo": p["wo"].astype(MXU_DTYPE), "bo": p["bo"],
        "ln2_g": p["ln2_g"], "ln2_b": p["ln2_b"],
        "wfc": p["wfc"].astype(MXU_DTYPE), "bfc": p["bfc"],
        "wpr": p["wpr"].astype(MXU_DTYPE), "bpr": p["bpr"],
    }


def gpt2_block(x, kp):
    """x: (B, T, C) float32.  kp: packed params (see pack_params)."""
    B, T, C = x.shape
    assert C == N_EMBD and C % N_HEAD == 0
    c_pad = ((C + LANE - 1) // LANE) * LANE

    def const_spec(arr):
        shape = arr.shape
        return pl.BlockSpec(shape, lambda b, _s=shape: (0,) * len(_s))

    in_specs = [
        pl.BlockSpec((1, T, C), lambda b: (b, 0, 0)),          # x
        const_spec(kp["ln1_g"]), const_spec(kp["ln1_b"]),
        const_spec(kp["wqkv"]), const_spec(kp["bqkv"]),
        const_spec(kp["wo"]), const_spec(kp["bo"]),
        const_spec(kp["ln2_g"]), const_spec(kp["ln2_b"]),
        const_spec(kp["wfc"]), const_spec(kp["bfc"]),
        const_spec(kp["wpr"]), const_spec(kp["bpr"]),
    ]

    # Grid over B, marked "parallel": on v7x each TensorCore takes a batch
    # element; on v5e/v6e it is a 2-step pipelined loop (weights use constant
    # block indices, so they stay resident across steps).
    # TODO(synk): at real GPT-2 dims (T=1024, C=768) switch to row tiles over
    # B*T for LN/QKV/MLP and flash-style (tq, tk) KV tiling for attention,
    # sized against v7x's 64 MiB VMEM (half of v5e/v6e).
    out = pl.pallas_call(
        functools.partial(block_kernel, n_head=N_HEAD),
        out_shape=jax.ShapeDtypeStruct((B, T, c_pad), x.dtype),
        grid=(B,),
        in_specs=in_specs,
        out_specs=pl.BlockSpec((1, T, c_pad), lambda b: (b, 0, 0)),
        compiler_params=pltpu.CompilerParams(dimension_semantics=("parallel",)),
    )(x, kp["ln1_g"], kp["ln1_b"], kp["wqkv"], kp["bqkv"], kp["wo"], kp["bo"],
      kp["ln2_g"], kp["ln2_b"], kp["wfc"], kp["bfc"], kp["wpr"], kp["bpr"])
    return out[..., :C]


def init_params(key):
    """Deterministic synthetic weights (shapes implied by the nn.Module)."""
    ks = jax.random.split(key, 12)
    C, F = N_EMBD, 4 * N_EMBD
    std = 0.02
    return {
        "ln1_g": jnp.ones((1, C), jnp.float32),
        "ln1_b": jnp.zeros((1, C), jnp.float32),
        "wq": std * jax.random.normal(ks[0], (C, C), jnp.float32),
        "bq": std * jax.random.normal(ks[1], (1, C), jnp.float32),
        "wk": std * jax.random.normal(ks[2], (C, C), jnp.float32),
        "bk": std * jax.random.normal(ks[3], (1, C), jnp.float32),
        "wv": std * jax.random.normal(ks[4], (C, C), jnp.float32),
        "bv": std * jax.random.normal(ks[5], (1, C), jnp.float32),
        "wo": std * jax.random.normal(ks[6], (C, C), jnp.float32),
        "bo": std * jax.random.normal(ks[7], (1, C), jnp.float32),
        "ln2_g": jnp.ones((1, C), jnp.float32),
        "ln2_b": jnp.zeros((1, C), jnp.float32),
        "wfc": std * jax.random.normal(ks[8], (C, F), jnp.float32),
        "bfc": std * jax.random.normal(ks[9], (1, F), jnp.float32),
        "wpr": std * jax.random.normal(ks[10], (F, C), jnp.float32),
        "bpr": std * jax.random.normal(ks[11], (1, C), jnp.float32),
    }


def reference_block(x, p):
    """Pure-JAX f32 reference matching the PyTorch forward exactly."""
    B, T, C = x.shape

    def ln(v, g, b):
        mu = v.mean(-1, keepdims=True)
        var = ((v - mu) ** 2).mean(-1, keepdims=True)
        return (v - mu) / jnp.sqrt(var + LN_EPS) * g + b

    h = ln(x, p["ln1_g"], p["ln1_b"])
    q = h @ p["wq"] + p["bq"]
    k = h @ p["wk"] + p["bk"]
    v = h @ p["wv"] + p["bv"]
    q = q.reshape(B, T, N_HEAD, HEAD_DIM).transpose(0, 2, 1, 3)
    k = k.reshape(B, T, N_HEAD, HEAD_DIM).transpose(0, 2, 1, 3)
    v = v.reshape(B, T, N_HEAD, HEAD_DIM).transpose(0, 2, 1, 3)
    s = jnp.einsum("bhqd,bhkd->bhqk", q, k) / (HEAD_DIM ** 0.5)
    mask = jnp.tril(jnp.ones((T, T), bool))
    s = jnp.where(mask, s, -jnp.inf)
    a = jax.nn.softmax(s, axis=-1)
    y = jnp.einsum("bhqk,bhkd->bhqd", a, v).transpose(0, 2, 1, 3).reshape(B, T, C)
    x = x + (y @ p["wo"] + p["bo"])

    h2 = ln(x, p["ln2_g"], p["ln2_b"])
    f = h2 @ p["wfc"] + p["bfc"]
    c = 0.7978845608028654
    f = 0.5 * f * (1.0 + jnp.tanh(c * (f + 0.044715 * f ** 3)))
    f = f @ p["wpr"] + p["bpr"]
    return x + f


if __name__ == "__main__":
    key = jax.random.PRNGKey(0)
    kx, kw = jax.random.split(key)
    B, T, C = 2, 16, N_EMBD
    x = jax.random.normal(kx, (B, T, C), jnp.float32)
    params = init_params(kw)
    packed = pack_params(params)           # one-time packing (fused QKV, bf16)

    out = jax.block_until_ready(gpt2_block(x, packed))
    ref = reference_block(x, params)

    assert out.shape == (B, T, C)
    max_err = float(jnp.max(jnp.abs(out - ref)))
    # tolerance covers bf16 MXU inputs + the EUP approx-reciprocal in softmax
    assert jnp.allclose(out, ref, rtol=1e-2, atol=1e-2), \
        f"mismatch vs reference (max abs err {max_err})"
    print("KERNEL_OK")
</pallas_src>

<mosaic_0001>
module attributes {stable_mosaic.version = 11 : i64} {
  func.func @block_kernel(%arg0: i32, %arg1: memref<1x16x64xf32, #tpu.memory_space<vmem>>, %arg2: memref<1x64xf32, #tpu.memory_space<vmem>>, %arg3: memref<1x64xf32, #tpu.memory_space<vmem>>, %arg4: memref<64x192xbf16, #tpu.memory_space<vmem>>, %arg5: memref<1x192xf32, #tpu.memory_space<vmem>>, %arg6: memref<64x64xbf16, #tpu.memory_space<vmem>>, %arg7: memref<1x64xf32, #tpu.memory_space<vmem>>, %arg8: memref<1x64xf32, #tpu.memory_space<vmem>>, %arg9: memref<1x64xf32, #tpu.memory_space<vmem>>, %arg10: memref<64x256xbf16, #tpu.memory_space<vmem>>, %arg11: memref<1x256xf32, #tpu.memory_space<vmem>>, %arg12: memref<256x64xbf16, #tpu.memory_space<vmem>>, %arg13: memref<1x64xf32, #tpu.memory_space<vmem>>, %arg14: memref<1x16x128xf32, #tpu.memory_space<vmem>>) attributes {dimension_semantics = [#tpu.dimension_semantics<parallel>], iteration_bounds = array<i64: 2>, scalar_prefetch = 0 : i64, scratch_operands = 0 : i64, tpu.core_type = #tpu.core_type<tc>, window_params = [{transform_indices = @transform_0, window_bounds = array<i64: 1, 16, 64>}, {pipeline_mode = #tpu.pipeline_mode<synchronous>, transform_indices = @transform_1, window_bounds = array<i64: 1, 64>}, {pipeline_mode = #tpu.pipeline_mode<synchronous>, transform_indices = @transform_2, window_bounds = array<i64: 1, 64>}, {pipeline_mode = #tpu.pipeline_mode<synchronous>, transform_indices = @transform_3, window_bounds = array<i64: 64, 192>}, {pipeline_mode = #tpu.pipeline_mode<synchronous>, transform_indices = @transform_4, window_bounds = array<i64: 1, 192>}, {pipeline_mode = #tpu.pipeline_mode<synchronous>, transform_indices = @transform_5, window_bounds = array<i64: 64, 64>}, {pipeline_mode = #tpu.pipeline_mode<synchronous>, transform_indices = @transform_6, window_bounds = array<i64: 1, 64>}, {pipeline_mode = #tpu.pipeline_mode<synchronous>, transform_indices = @transform_7, window_bounds = array<i64: 1, 64>}, {pipeline_mode = #tpu.pipeline_mode<synchronous>, transform_indices = @transform_8, window_bounds = array<i64: 1, 64>}, {pipeline_mode = #tpu.pipeline_mode<synchronous>, transform_indices = @transform_9, window_bounds = array<i64: 64, 256>}, {pipeline_mode = #tpu.pipeline_mode<synchronous>, transform_indices = @transform_10, window_bounds = array<i64: 1, 256>}, {pipeline_mode = #tpu.pipeline_mode<synchronous>, transform_indices = @transform_11, window_bounds = array<i64: 256, 64>}, {pipeline_mode = #tpu.pipeline_mode<synchronous>, transform_indices = @transform_12, window_bounds = array<i64: 1, 64>}, {transform_indices = @transform_13, window_bounds = array<i64: 1, 16, 128>}]} {
    %c0 = arith.constant 0 : index
    %c0_0 = arith.constant 0 : index
    %c0_1 = arith.constant 0 : index
    %0 = vector.load %arg1[%c0, %c0_0, %c0_1] : memref<1x16x64xf32, #tpu.memory_space<vmem>>, vector<1x16x64xf32>
    %1 = vector.shape_cast %0 : vector<1x16x64xf32> to vector<16x64xf32>
    %c0_2 = arith.constant 0 : index
    %c0_3 = arith.constant 0 : index
    %2 = vector.load %arg2[%c0_2, %c0_3] : memref<1x64xf32, #tpu.memory_space<vmem>>, vector<1x64xf32>
    %c0_4 = arith.constant 0 : index
    %c0_5 = arith.constant 0 : index
    %3 = vector.load %arg3[%c0_4, %c0_5] : memref<1x64xf32, #tpu.memory_space<vmem>>, vector<1x64xf32>
    %cst = arith.constant dense<0.000000e+00> : vector<16xf32>
    %4 = vector.multi_reduction <add>, %1, %cst [1] : vector<16x64xf32> to vector<16xf32>
    %5 = vector.shape_cast %4 : vector<16xf32> to vector<16x1xf32>
    %cst_6 = arith.constant 6.400000e+01 : f32
    %6 = vector.broadcast %cst_6 : f32 to vector<16x1xf32>
    %7 = arith.divf %5, %6 : vector<16x1xf32>
    %8 = vector.broadcast %7 : vector<16x1xf32> to vector<16x64xf32>
    %9 = arith.subf %1, %8 : vector<16x64xf32>
    %10 = arith.mulf %9, %9 : vector<16x64xf32>
    %cst_7 = arith.constant dense<0.000000e+00> : vector<16xf32>
    %11 = vector.multi_reduction <add>, %10, %cst_7 [1] : vector<16x64xf32> to vector<16xf32>
    %12 = vector.shape_cast %11 : vector<16xf32> to vector<16x1xf32>
    %cst_8 = arith.constant 6.400000e+01 : f32
    %13 = vector.broadcast %cst_8 : f32 to vector<16x1xf32>
    %14 = arith.divf %12, %13 : vector<16x1xf32>
    %15 = vector.broadcast %7 : vector<16x1xf32> to vector<16x64xf32>
    %16 = arith.subf %1, %15 : vector<16x64xf32>
    %cst_9 = arith.constant 9.99999974E-6 : f32
    %17 = vector.broadcast %cst_9 : f32 to vector<16x1xf32>
    %18 = arith.addf %14, %17 : vector<16x1xf32>
    %19 = math.rsqrt %18 : vector<16x1xf32>
    %20 = vector.broadcast %19 : vector<16x1xf32> to vector<16x64xf32>
    %21 = arith.mulf %16, %20 : vector<16x64xf32>
    %22 = vector.broadcast %2 : vector<1x64xf32> to vector<16x64xf32>
    %23 = arith.mulf %21, %22 : vector<16x64xf32>
    %24 = vector.broadcast %3 : vector<1x64xf32> to vector<16x64xf32>
    %25 = arith.addf %23, %24 : vector<16x64xf32>
    %c0_10 = arith.constant 0 : index
    %c0_11 = arith.constant 0 : index
    %26 = vector.load %arg4[%c0_10, %c0_11] : memref<64x192xbf16, #tpu.memory_space<vmem>>, vector<64x192xbf16>
    %27 = arith.truncf %25 : vector<16x64xf32> to vector<16x64xbf16>
    %cst_12 = arith.constant dense<0.000000e+00> : vector<16x192xf32>
    %28 = tpu.matmul %27, %26, %cst_12 {dimension_numbers = #tpu.dot_dimension_numbers<[1], [0], [0], [1], [0, 0, 1, 1], [], []>} : vector<16x64xbf16>, vector<64x192xbf16>, vector<16x192xf32> -> vector<16x192xf32>
    %c0_13 = arith.constant 0 : index
    %c0_14 = arith.constant 0 : index
    %29 = vector.load %arg5[%c0_13, %c0_14] : memref<1x192xf32, #tpu.memory_space<vmem>>, vector<1x192xf32>
    %30 = vector.broadcast %29 : vector<1x192xf32> to vector<16x192xf32>
    %31 = arith.addf %28, %30 : vector<16x192xf32>
    %32 = vector.extract_strided_slice %31 {offsets = [0, 0], sizes = [16, 64], strides = [1, 1]} : vector<16x192xf32> to vector<16x64xf32>
    %33 = vector.extract_strided_slice %31 {offsets = [0, 64], sizes = [16, 64], strides = [1, 1]} : vector<16x192xf32> to vector<16x64xf32>
    %34 = vector.extract_strided_slice %31 {offsets = [0, 128], sizes = [16, 64], strides = [1, 1]} : vector<16x192xf32> to vector<16x64xf32>
    %35 = vector.shape_cast %32 : vector<16x64xf32> to vector<16x4x16xf32>
    %36 = tpu.transpose %35, [1, 0, 2] : vector<16x4x16xf32> -> vector<4x16x16xf32>
    %37 = vector.shape_cast %33 : vector<16x64xf32> to vector<16x4x16xf32>
    %38 = tpu.transpose %37, [1, 0, 2] : vector<16x4x16xf32> -> vector<4x16x16xf32>
    %39 = vector.shape_cast %34 : vector<16x64xf32> to vector<16x4x16xf32>
    %40 = tpu.transpose %39, [1, 0, 2] : vector<16x4x16xf32> -> vector<4x16x16xf32>
    %41 = arith.truncf %36 : vector<4x16x16xf32> to vector<4x16x16xbf16>
    %42 = arith.truncf %38 : vector<4x16x16xf32> to vector<4x16x16xbf16>
    "tpu.trace_start"() <{level = 10 : i32, message = "htd,hsd->hts"}> : () -> ()
    %cst_15 = arith.constant dense<0.000000e+00> : vector<4x16x16xf32>
    %43 = tpu.matmul %41, %42, %cst_15 {dimension_numbers = #tpu.dot_dimension_numbers<[2], [2], [1], [1], [0, 0, 0, 1, 1, 1], [0], [0]>} : vector<4x16x16xbf16>, vector<4x16x16xbf16>, vector<4x16x16xf32> -> vector<4x16x16xf32>
    "tpu.trace_stop"() : () -> ()
    %44 = tpu.iota {dimensions = array<i32: 0>} : vector<16x16xi32>
    %45 = tpu.iota {dimensions = array<i32: 1>} : vector<16x16xi32>
    %46 = arith.cmpi sle, %45, %44 : vector<16x16xi32>
    %47 = vector.shape_cast %46 : vector<16x16xi1> to vector<1x16x16xi1>
    %cst_16 = arith.constant -1.000000e+30 : f32
    %48 = vector.shape_cast %47 : vector<1x16x16xi1> to vector<1x16x16xi1>
    %49 = vector.broadcast %48 : vector<1x16x16xi1> to vector<4x16x16xi1>
    %50 = vector.broadcast %cst_16 : f32 to vector<4x16x16xf32>
    %51 = arith.select %49, %43, %50 : vector<4x16x16xi1>, vector<4x16x16xf32>
    %cst_17 = arith.constant dense<0xFF800000> : vector<4x16xf32>
    %52 = vector.multi_reduction <maximumf>, %51, %cst_17 [2] : vector<4x16x16xf32> to vector<4x16xf32>
    %53 = vector.shape_cast %52 : vector<4x16xf32> to vector<4x16x1xf32>
    %54 = vector.broadcast %53 : vector<4x16x1xf32> to vector<4x16x16xf32>
    %55 = arith.subf %51, %54 : vector<4x16x16xf32>
    %56 = math.exp %55 : vector<4x16x16xf32>
    %cst_18 = arith.constant dense<0.000000e+00> : vector<4x16xf32>
    %57 = vector.multi_reduction <add>, %56, %cst_18 [2] : vector<4x16x16xf32> to vector<4x16xf32>
    %58 = vector.shape_cast %57 : vector<4x16xf32> to vector<4x16x1xf32>
    %59 = tpu.reciprocal %58 {approx = true} : vector<4x16x1xf32> -> vector<4x16x1xf32>
    %60 = vector.broadcast %59 : vector<4x16x1xf32> to vector<4x16x16xf32>
    %61 = arith.mulf %56, %60 : vector<4x16x16xf32>
    %62 = arith.truncf %61 : vector<4x16x16xf32> to vector<4x16x16xbf16>
    %63 = arith.truncf %40 : vector<4x16x16xf32> to vector<4x16x16xbf16>
    "tpu.trace_start"() <{level = 10 : i32, message = "hts,hsd->htd"}> : () -> ()
    %cst_19 = arith.constant dense<0.000000e+00> : vector<4x16x16xf32>
    %64 = tpu.matmul %62, %63, %cst_19 {dimension_numbers = #tpu.dot_dimension_numbers<[2], [1], [1], [2], [0, 0, 0, 1, 1, 2], [0], [0]>} : vector<4x16x16xbf16>, vector<4x16x16xbf16>, vector<4x16x16xf32> -> vector<4x16x16xf32>
    "tpu.trace_stop"() : () -> ()
    %65 = tpu.transpose %64, [1, 0, 2] : vector<4x16x16xf32> -> vector<16x4x16xf32>
    %66 = vector.shape_cast %65 : vector<16x4x16xf32> to vector<16x64xf32>
    %c0_20 = arith.constant 0 : index
    %c0_21 = arith.constant 0 : index
    %67 = vector.load %arg6[%c0_20, %c0_21] : memref<64x64xbf16, #tpu.memory_space<vmem>>, vector<64x64xbf16>
    %68 = arith.truncf %66 : vector<16x64xf32> to vector<16x64xbf16>
    %cst_22 = arith.constant dense<0.000000e+00> : vector<16x64xf32>
    %69 = tpu.matmul %68, %67, %cst_22 {dimension_numbers = #tpu.dot_dimension_numbers<[1], [0], [0], [1], [0, 0, 1, 1], [], []>} : vector<16x64xbf16>, vector<64x64xbf16>, vector<16x64xf32> -> vector<16x64xf32>
    %70 = arith.addf %1, %69 : vector<16x64xf32>
    %c0_23 = arith.constant 0 : index
    %c0_24 = arith.constant 0 : index
    %71 = vector.load %arg7[%c0_23, %c0_24] : memref<1x64xf32, #tpu.memory_space<vmem>>, vector<1x64xf32>
    %72 = vector.broadcast %71 : vector<1x64xf32> to vector<16x64xf32>
    %73 = arith.addf %70, %72 : vector<16x64xf32>
    %c0_25 = arith.constant 0 : index
    %c0_26 = arith.constant 0 : index
    %74 = vector.load %arg8[%c0_25, %c0_26] : memref<1x64xf32, #tpu.memory_space<vmem>>, vector<1x64xf32>
    %c0_27 = arith.constant 0 : index
    %c0_28 = arith.constant 0 : index
    %75 = vector.load %arg9[%c0_27, %c0_28] : memref<1x64xf32, #tpu.memory_space<vmem>>, vector<1x64xf32>
    %cst_29 = arith.constant dense<0.000000e+00> : vector<16xf32>
    %76 = vector.multi_reduction <add>, %73, %cst_29 [1] : vector<16x64xf32> to vector<16xf32>
    %77 = vector.shape_cast %76 : vector<16xf32> to vector<16x1xf32>
    %cst_30 = arith.constant 6.400000e+01 : f32
    %78 = vector.broadcast %cst_30 : f32 to vector<16x1xf32>
    %79 = arith.divf %77, %78 : vector<16x1xf32>
    %80 = vector.broadcast %79 : vector<16x1xf32> to vector<16x64xf32>
    %81 = arith.subf %73, %80 : vector<16x64xf32>
    %82 = arith.mulf %81, %81 : vector<16x64xf32>
    %cst_31 = arith.constant dense<0.000000e+00> : vector<16xf32>
    %83 = vector.multi_reduction <add>, %82, %cst_31 [1] : vector<16x64xf32> to vector<16xf32>
    %84 = vector.shape_cast %83 : vector<16xf32> to vector<16x1xf32>
    %cst_32 = arith.constant 6.400000e+01 : f32
    %85 = vector.broadcast %cst_32 : f32 to vector<16x1xf32>
    %86 = arith.divf %84, %85 : vector<16x1xf32>
    %87 = vector.broadcast %79 : vector<16x1xf32> to vector<16x64xf32>
    %88 = arith.subf %73, %87 : vector<16x64xf32>
    %cst_33 = arith.constant 9.99999974E-6 : f32
    %89 = vector.broadcast %cst_33 : f32 to vector<16x1xf32>
    %90 = arith.addf %86, %89 : vector<16x1xf32>
    %91 = math.rsqrt %90 : vector<16x1xf32>
    %92 = vector.broadcast %91 : vector<16x1xf32> to vector<16x64xf32>
    %93 = arith.mulf %88, %92 : vector<16x64xf32>
    %94 = vector.broadcast %74 : vector<1x64xf32> to vector<16x64xf32>
    %95 = arith.mulf %93, %94 : vector<16x64xf32>
    %96 = vector.broadcast %75 : vector<1x64xf32> to vector<16x64xf32>
    %97 = arith.addf %95, %96 : vector<16x64xf32>
    %c0_34 = arith.constant 0 : index
    %c0_35 = arith.constant 0 : index
    %98 = vector.load %arg10[%c0_34, %c0_35] : memref<64x256xbf16, #tpu.memory_space<vmem>>, vector<64x256xbf16>
    %99 = arith.truncf %97 : vector<16x64xf32> to vector<16x64xbf16>
    %cst_36 = arith.constant dense<0.000000e+00> : vector<16x256xf32>
    %100 = tpu.matmul %99, %98, %cst_36 {dimension_numbers = #tpu.dot_dimension_numbers<[1], [0], [0], [1], [0, 0, 1, 1], [], []>} : vector<16x64xbf16>, vector<64x256xbf16>, vector<16x256xf32> -> vector<16x256xf32>
    %c0_37 = arith.constant 0 : index
    %c0_38 = arith.constant 0 : index
    %101 = vector.load %arg11[%c0_37, %c0_38] : memref<1x256xf32, #tpu.memory_space<vmem>>, vector<1x256xf32>
    %102 = vector.broadcast %101 : vector<1x256xf32> to vector<16x256xf32>
    %103 = arith.addf %100, %102 : vector<16x256xf32>
    %cst_39 = arith.constant 5.000000e-01 : f32
    %104 = vector.broadcast %cst_39 : f32 to vector<16x256xf32>
    %105 = arith.mulf %104, %103 : vector<16x256xf32>
    %cst_40 = arith.constant 4.471500e-02 : f32
    %106 = vector.broadcast %cst_40 : f32 to vector<16x256xf32>
    %107 = arith.mulf %106, %103 : vector<16x256xf32>
    %108 = arith.mulf %107, %103 : vector<16x256xf32>
    %109 = arith.mulf %108, %103 : vector<16x256xf32>
    %110 = arith.addf %103, %109 : vector<16x256xf32>
    %cst_41 = arith.constant 0.797884583 : f32
    %111 = vector.broadcast %cst_41 : f32 to vector<16x256xf32>
    %112 = arith.mulf %111, %110 : vector<16x256xf32>
    %113 = math.tanh %112 : vector<16x256xf32>
    %cst_42 = arith.constant 1.000000e+00 : f32
    %114 = vector.broadcast %cst_42 : f32 to vector<16x256xf32>
    %115 = arith.addf %114, %113 : vector<16x256xf32>
    %116 = arith.mulf %105, %115 : vector<16x256xf32>
    %c0_43 = arith.constant 0 : index
    %c0_44 = arith.constant 0 : index
    %117 = vector.load %arg12[%c0_43, %c0_44] : memref<256x64xbf16, #tpu.memory_space<vmem>>, vector<256x64xbf16>
    %118 = arith.truncf %116 : vector<16x256xf32> to vector<16x256xbf16>
    %cst_45 = arith.constant dense<0.000000e+00> : vector<16x64xf32>
    %119 = tpu.matmul %118, %117, %cst_45 {dimension_numbers = #tpu.dot_dimension_numbers<[1], [0], [0], [1], [0, 0, 1, 1], [], []>} : vector<16x256xbf16>, vector<256x64xbf16>, vector<16x64xf32> -> vector<16x64xf32>
    %120 = arith.addf %73, %119 : vector<16x64xf32>
    %c0_46 = arith.constant 0 : index
    %c0_47 = arith.constant 0 : index
    %121 = vector.load %arg13[%c0_46, %c0_47] : memref<1x64xf32, #tpu.memory_space<vmem>>, vector<1x64xf32>
    %122 = vector.broadcast %121 : vector<1x64xf32> to vector<16x64xf32>
    %123 = arith.addf %120, %122 : vector<16x64xf32>
    %cst_48 = arith.constant 0.000000e+00 : f32
    %124 = vector.broadcast %cst_48 : f32 to vector<16x64xf32>
    %125 = tpu.concatenate %123, %124 in 1 : vector<16x64xf32>, vector<16x64xf32> -> vector<16x128xf32>
    %c0_49 = arith.constant 0 : index
    %c0_50 = arith.constant 0 : index
    %c0_51 = arith.constant 0 : index
    %126 = vector.load %arg14[%c0_49, %c0_50, %c0_51] : memref<1x16x128xf32, #tpu.memory_space<vmem>>, vector<1x16x128xf32>
    %127 = vector.shape_cast %126 : vector<1x16x128xf32> to vector<16x128xf32>
    %128 = vector.shape_cast %125 : vector<16x128xf32> to vector<1x16x128xf32>
    tpu.vector_store %arg14[%c0_49, %c0_50, %c0_51], %128 {strides = array<i32>} : memref<1x16x128xf32, #tpu.memory_space<vmem>>, vector<1x16x128xf32>,
    return
  }
  func.func @transform_0(%arg0: i32) -> (i32, i32, i32) {
    %c0_i32 = arith.constant 0 : i32
    %c0_i32_0 = arith.constant 0 : i32
    %c0_i32_1 = arith.constant 0 : i32
    return %arg0, %c0_i32, %c0_i32_0 : i32, i32, i32
  }
  func.func @transform_1(%arg0: i32) -> (i32, i32) {
    %c0_i32 = arith.constant 0 : i32
    %c0_i32_0 = arith.constant 0 : i32
    %c0_i32_1 = arith.constant 0 : i32
    return %c0_i32, %c0_i32_0 : i32, i32
  }
  func.func @transform_2(%arg0: i32) -> (i32, i32) {
    %c0_i32 = arith.constant 0 : i32
    %c0_i32_0 = arith.constant 0 : i32
    %c0_i32_1 = arith.constant 0 : i32
    return %c0_i32, %c0_i32_0 : i32, i32
  }
  func.func @transform_3(%arg0: i32) -> (i32, i32) {
    %c0_i32 = arith.constant 0 : i32
    %c0_i32_0 = arith.constant 0 : i32
    %c0_i32_1 = arith.constant 0 : i32
    return %c0_i32, %c0_i32_0 : i32, i32
  }
  func.func @transform_4(%arg0: i32) -> (i32, i32) {
    %c0_i32 = arith.constant 0 : i32
    %c0_i32_0 = arith.constant 0 : i32
    %c0_i32_1 = arith.constant 0 : i32
    return %c0_i32, %c0_i32_0 : i32, i32
  }
  func.func @transform_5(%arg0: i32) -> (i32, i32) {
    %c0_i32 = arith.constant 0 : i32
    %c0_i32_0 = arith.constant 0 : i32
    %c0_i32_1 = arith.constant 0 : i32
    return %c0_i32, %c0_i32_0 : i32, i32
  }
  func.func @transform_6(%arg0: i32) -> (i32, i32) {
    %c0_i32 = arith.constant 0 : i32
    %c0_i32_0 = arith.constant 0 : i32
    %c0_i32_1 = arith.constant 0 : i32
    return %c0_i32, %c0_i32_0 : i32, i32
  }
  func.func @transform_7(%arg0: i32) -> (i32, i32) {
    %c0_i32 = arith.constant 0 : i32
    %c0_i32_0 = arith.constant 0 : i32
    %c0_i32_1 = arith.constant 0 : i32
    return %c0_i32, %c0_i32_0 : i32, i32
  }
  func.func @transform_8(%arg0: i32) -> (i32, i32) {
    %c0_i32 = arith.constant 0 : i32
    %c0_i32_0 = arith.constant 0 : i32
    %c0_i32_1 = arith.constant 0 : i32
    return %c0_i32, %c0_i32_0 : i32, i32
  }
  func.func @transform_9(%arg0: i32) -> (i32, i32) {
    %c0_i32 = arith.constant 0 : i32
    %c0_i32_0 = arith.constant 0 : i32
    %c0_i32_1 = arith.constant 0 : i32
    return %c0_i32, %c0_i32_0 : i32, i32
  }
  func.func @transform_10(%arg0: i32) -> (i32, i32) {
    %c0_i32 = arith.constant 0 : i32
    %c0_i32_0 = arith.constant 0 : i32
    %c0_i32_1 = arith.constant 0 : i32
    return %c0_i32, %c0_i32_0 : i32, i32
  }
  func.func @transform_11(%arg0: i32) -> (i32, i32) {
    %c0_i32 = arith.constant 0 : i32
    %c0_i32_0 = arith.constant 0 : i32
    %c0_i32_1 = arith.constant 0 : i32
    return %c0_i32, %c0_i32_0 : i32, i32
  }
  func.func @transform_12(%arg0: i32) -> (i32, i32) {
    %c0_i32 = arith.constant 0 : i32
    %c0_i32_0 = arith.constant 0 : i32
    %c0_i32_1 = arith.constant 0 : i32
    return %c0_i32, %c0_i32_0 : i32, i32
  }
  func.func @transform_13(%arg0: i32) -> (i32, i32, i32) {
    %c0_i32 = arith.constant 0 : i32
    %c0_i32_0 = arith.constant 0 : i32
    %c0_i32_1 = arith.constant 0 : i32
    return %arg0, %c0_i32, %c0_i32_0 : i32, i32, i32
  }
}

</mosaic_0001>

<llo_original>
// kernel: tpu_custom_call.1
$region0: #{tpu_custom_call.1}
  #allocation0 [shape = 'u32[]', space=smem, size = 0x4, offset = 0x4, fixed_abs, tag = 'smem constant byte address 0x4 - core index']
  #allocation1 [shape = 'u32[72,128]{1,0:T(1,128)}', space=vmem, size = 0x9000, scoped, tag = 'internal scratch']
  %s0 = inlined_call_operand.vmem [shape: f32[2,16,64], index: 0, kind: input, shape index: {}]
  %s1 = inlined_call_operand.hbm [shape: f32[1,64], index: 1, kind: input, shape index: {}]
  %s2 = inlined_call_operand.hbm [shape: f32[1,64], index: 2, kind: input, shape index: {}]
  %s3 = inlined_call_operand.vmem [shape: bf16[64,192], index: 3, kind: input, shape index: {}]
  %s4 = inlined_call_operand.vmem [shape: f32[1,192], index: 4, kind: input, shape index: {}]
  %s5 = inlined_call_operand.vmem [shape: bf16[64,64], index: 5, kind: input, shape index: {}]
  %s6 = inlined_call_operand.vmem [shape: f32[1,64], index: 6, kind: input, shape index: {}]
  %s7 = inlined_call_operand.hbm [shape: f32[1,64], index: 7, kind: input, shape index: {}]
  %s8 = inlined_call_operand.hbm [shape: f32[1,64], index: 8, kind: input, shape index: {}]
  %s9 = inlined_call_operand.vmem [shape: bf16[64,256], index: 9, kind: input, shape index: {}]
  %s10 = inlined_call_operand.vmem [shape: f32[1,256], index: 10, kind: input, shape index: {}]
  %s11 = inlined_call_operand.vmem [shape: bf16[256,64], index: 11, kind: input, shape index: {}]
  %s12 = inlined_call_operand.vmem [shape: f32[1,64], index: 12, kind: input, shape index: {}]
  %s13 = inlined_call_operand.hbm [shape: f32[2,16,128], index: 13, kind: output, shape index: {}]
  %s14 = sld [smem:[#allocation0]]
  $region101: #{tpu_custom_call.1} parent=0
    _
  %s16 = ssub.s32 1, %s14
  %s17 = scalar_select 0, %s16, %s14
  $region1: #{tpu_custom_call.1} parent=0
    #allocation2 [shape = 'u8[512]{0}', space=vmem, size = 0x400, scoped, tag = 'input window, operand 1, single buffered']
    #allocation3 [shape = 's32[2]{0}', space=sflag, size = 0x8, scoped, tag = 'scoped memory for tpu_custom_call.1']
    #allocation4 [shape = 's32[2]{0}', space=sflag, size = 0x8, scoped, tag = 'scoped memory for tpu_custom_call.1']
    #allocation5 [shape = 'u8[512]{0}', space=vmem, size = 0x400, scoped, tag = 'input window, operand 2, single buffered']
    #allocation6 [shape = 's32[1]{0}', space=sflag, size = 0x4, scoped, tag = 'scoped memory for tpu_custom_call.1']
    #allocation7 [shape = 'u8[512]{0}', space=vmem, size = 0x400, scoped, tag = 'input window, operand 7, single buffered']
    #allocation8 [shape = 'u8[512]{0}', space=vmem, size = 0x400, scoped, tag = 'input window, operand 8, single buffered']
    #allocation9 [shape = 's32[1]{0}', space=sflag, size = 0x4, scoped, tag = 'scoped memory for tpu_custom_call.1']
    #allocation10 [shape = 'u8[16384]{0}', space=vmem, size = 0x4000, scoped, tag = 'output window, operand 0']
    %18 = vsyncpa [#allocation3], 0
    %19 = vsyncpa [#allocation6], 0
    %20 = vsyncpa [#allocation9], 0
    %21 = vsyncpa [#allocation4], 0
    %s22 = scalar_lea.sflag [#allocation4], 1
    %23 = vsyncpa %s22, 0
    loop: start=0, step=1, limit=4
    $region2: #{tpu_custom_call.1} parent=1 // loop_pre_header
      _
    $region3: #{tpu_custom_call.1} parent=1 // loop_header
      %s25 = sphi 0, %s29
      %p26 = scmp.ge.s32.totalorder %s25, 4
      %s35 = sphi 0, %s37
      %s38 = sphi 0, %s35
      %s39 = sphi 0, %s38
      %s55 = sphi 0, %s39
      %s59 = sphi 0, %s59
      %s61 = sphi 0, %s59
      %s62 = sphi 0, %s61
      %s76 = sphi 0, %s62
      %s80 = sphi 0, %s80
      %s82 = sphi 0, %s80
      %s83 = sphi 0, %s82
      %s97 = sphi 0, %s83
      %s101 = sphi 0, %s101
      %s103 = sphi 0, %s101
      %s104 = sphi 0, %s103
      %s118 = sphi 0, %s104
      %s122 = sphi 0, %s122
      %s124 = sphi 0, %s122
      %s125 = sphi 0, %s124
      %s139 = sphi 0, %s125
      %s143 = sphi 0, %s143
      %s145 = sphi 0, %s143
      %s146 = sphi 0, %s145
      %s160 = sphi 0, %s146
      %s164 = sphi 0, %s164
      %s166 = sphi 0, %s164
      %s167 = sphi 0, %s166
      %s181 = sphi 0, %s167
      %s185 = sphi 0, %s185
      %s187 = sphi 0, %s185
      %s188 = sphi 0, %s187
      %s202 = sphi 0, %s188
      %s206 = sphi 0, %s206
      %s208 = sphi 0, %s206
      %s209 = sphi 0, %s208
      %s223 = sphi 0, %s209
      %s227 = sphi 0, %s227
      %s229 = sphi 0, %s227
      %s230 = sphi 0, %s229
      %s244 = sphi 0, %s230
      %s248 = sphi 0, %s248
      %s250 = sphi 0, %s248
      %s251 = sphi 0, %s250
      %s265 = sphi 0, %s251
      %s269 = sphi 0, %s269
      %s271 = sphi 0, %s269
      %s272 = sphi 0, %s271
      %s286 = sphi 0, %s272
      %s290 = sphi 0, %s290
      %s292 = sphi 0, %s290
      %s293 = sphi 0, %s292
      %s307 = sphi 0, %s293
      %s313 = sphi 0, %s315
      %s316 = sphi 0, %s313
      %s317 = sphi 0, %s316
      %s333 = sphi 0, %s317
    $region4: #{tpu_custom_call.1} parent=1 // loop_header_branch
      %28 = sbr.rel (%p26) target = $region8
    $region5: #{tpu_custom_call.1} parent=1 // loop_body
      %s30 = ssub.s32 %s25, 1
      %s31 = ssub.s32 %s25, 2
      %s32 = sadd.s32 %s25, 1
      %s33 = ssub.s32 %s25, %s32
      %p34 = scmp.eq.s32.totalorder %s33, 0
      %s36 = sadd.s32 %s35, 1
      %s37 = scalar_select %p34, %s35, %s36
      %p40 = pneg %p34
      %p41 = scmp.eq.s32.totalorder %s25, 1
      %p42 = por %p40, %p41
      %p43 = scmp.ne.s32.totalorder %s35, %s38
      %p44 = scmp.eq.s32.totalorder %s25, 0
      %p45 = por %p43, %p44
      %p46 = scmp.ne.s32.totalorder %s35, %s38
      %p47 = scmp.eq.s32.totalorder %s30, 1
      %p48 = por %p46, %p47
      %p49 = scmp.ne.s32.totalorder %s38, %s39
      %p50 = scmp.eq.s32.totalorder %s30, 0
      %p51 = por %p49, %p50
      %p52 = scmp.ne.s32.totalorder %s38, %s39
      %p53 = scmp.eq.s32.totalorder %s31, 1
      %p54 = por %p52, %p53
      %p56 = scmp.ne.s32.totalorder %s39, %s55
      %p57 = scmp.eq.s32.totalorder %s31, 0
      %p58 = por %p56, %p57
      %s60 = sadd.s32 %s59, 1
      %p63 = scmp.eq.s32.totalorder %s25, 1
      %p64 = scmp.ne.s32.totalorder %s59, %s61
      %p65 = scmp.eq.s32.totalorder %s25, 0
      %p66 = por %p64, %p65
      %p67 = scmp.ne.s32.totalorder %s59, %s61
      %p68 = scmp.eq.s32.totalorder %s30, 1
      %p69 = por %p67, %p68
      %p70 = scmp.ne.s32.totalorder %s61, %s62
      %p71 = scmp.eq.s32.totalorder %s30, 0
      %p72 = por %p70, %p71
      %p73 = scmp.ne.s32.totalorder %s61, %s62
      %p74 = scmp.eq.s32.totalorder %s31, 1
      %p75 = por %p73, %p74
      %p77 = scmp.ne.s32.totalorder %s62, %s76
      %p78 = scmp.eq.s32.totalorder %s31, 0
      %p79 = por %p77, %p78
      %s81 = sadd.s32 %s80, 1
      %p84 = scmp.eq.s32.totalorder %s25, 1
      %p85 = scmp.ne.s32.totalorder %s80, %s82
      %p86 = scmp.eq.s32.totalorder %s25, 0
      %p87 = por %p85, %p86
      %p88 = scmp.ne.s32.totalorder %s80, %s82
      %p89 = scmp.eq.s32.totalorder %s30, 1
      %p90 = por %p88, %p89
      %p91 = scmp.ne.s32.totalorder %s82, %s83
      %p92 = scmp.eq.s32.totalorder %s30, 0
      %p93 = por %p91, %p92
      %p94 = scmp.ne.s32.totalorder %s82, %s83
      %p95 = scmp.eq.s32.totalorder %s31, 1
      %p96 = por %p94, %p95
      %p98 = scmp.ne.s32.totalorder %s83, %s97
      %p99 = scmp.eq.s32.totalorder %s31, 0
      %p100 = por %p98, %p99
      %s102 = sadd.s32 %s101, 1
      %p105 = scmp.eq.s32.totalorder %s25, 1
      %p106 = scmp.ne.s32.totalorder %s101, %s103
      %p107 = scmp.eq.s32.totalorder %s25, 0
      %p108 = por %p106, %p107
      %p109 = scmp.ne.s32.totalorder %s101, %s103
      %p110 = scmp.eq.s32.totalorder %s30, 1
      %p111 = por %p109, %p110
      %p112 = scmp.ne.s32.totalorder %s103, %s104
      %p113 = scmp.eq.s32.totalorder %s30, 0
      %p114 = por %p112, %p113
      %p115 = scmp.ne.s32.totalorder %s103, %s104
      %p116 = scmp.eq.s32.totalorder %s31, 1
      %p117 = por %p115, %p116
      %p119 = scmp.ne.s32.totalorder %s104, %s118
      %p120 = scmp.eq.s32.totalorder %s31, 0
      %p121 = por %p119, %p120
      %s123 = sadd.s32 %s122, 1
      %p126 = scmp.eq.s32.totalorder %s25, 1
      %p127 = scmp.ne.s32.totalorder %s122, %s124
      %p128 = scmp.eq.s32.totalorder %s25, 0
      %p129 = por %p127, %p128
      %p130 = scmp.ne.s32.totalorder %s122, %s124
      %p131 = scmp.eq.s32.totalorder %s30, 1
      %p132 = por %p130, %p131
      %p133 = scmp.ne.s32.totalorder %s124, %s125
      %p134 = scmp.eq.s32.totalorder %s30, 0
      %p135 = por %p133, %p134
      %p136 = scmp.ne.s32.totalorder %s124, %s125
      %p137 = scmp.eq.s32.totalorder %s31, 1
      %p138 = por %p136, %p137
      %p140 = scmp.ne.s32.totalorder %s125, %s139
      %p141 = scmp.eq.s32.totalorder %s31, 0
      %p142 = por %p140, %p141
      %s144 = sadd.s32 %s143, 1
      %p147 = scmp.eq.s32.totalorder %s25, 1
      %p148 = scmp.ne.s32.totalorder %s143, %s145
      %p149 = scmp.eq.s32.totalorder %s25, 0
      %p150 = por %p148, %p149
      %p151 = scmp.ne.s32.totalorder %s143, %s145
      %p152 = scmp.eq.s32.totalorder %s30, 1
      %p153 = por %p151, %p152
      %p154 = scmp.ne.s32.totalorder %s145, %s146
      %p155 = scmp.eq.s32.totalorder %s30, 0
      %p156 = por %p154, %p155
      %p157 = scmp.ne.s32.totalorder %s145, %s146
      %p158 = scmp.eq.s32.totalorder %s31, 1
      %p159 = por %p157, %p158
      %p161 = scmp.ne.s32.totalorder %s146, %s160
      %p162 = scmp.eq.s32.totalorder %s31, 0
      %p163 = por %p161, %p162
      %s165 = sadd.s32 %s164, 1
      %p168 = scmp.eq.s32.totalorder %s25, 1
      %p169 = scmp.ne.s32.totalorder %s164, %s166
      %p170 = scmp.eq.s32.totalorder %s25, 0
      %p171 = por %p169, %p170
      %p172 = scmp.ne.s32.totalorder %s164, %s166
      %p173 = scmp.eq.s32.totalorder %s30, 1
      %p174 = por %p172, %p173
      %p175 = scmp.ne.s32.totalorder %s166, %s167
      %p176 = scmp.eq.s32.totalorder %s30, 0
      %p177 = por %p175, %p176
      %p178 = scmp.ne.s32.totalorder %s166, %s167
      %p179 = scmp.eq.s32.totalorder %s31, 1
      %p180 = por %p178, %p179
      %p182 = scmp.ne.s32.totalorder %s167, %s181
      %p183 = scmp.eq.s32.totalorder %s31, 0
      %p184 = por %p182, %p183
      %s186 = sadd.s32 %s185, 1
      %p189 = scmp.eq.s32.totalorder %s25, 1
      %p190 = scmp.ne.s32.totalorder %s185, %s187
      %p191 = scmp.eq.s32.totalorder %s25, 0
      %p192 = por %p190, %p191
      %p193 = scmp.ne.s32.totalorder %s185, %s187
      %p194 = scmp.eq.s32.totalorder %s30, 1
      %p195 = por %p193, %p194
      %p196 = scmp.ne.s32.totalorder %s187, %s188
      %p197 = scmp.eq.s32.totalorder %s30, 0
      %p198 = por %p196, %p197
      %p199 = scmp.ne.s32.totalorder %s187, %s188
      %p200 = scmp.eq.s32.totalorder %s31, 1
      %p201 = por %p199, %p200
      %p203 = scmp.ne.s32.totalorder %s188, %s202
      %p204 = scmp.eq.s32.totalorder %s31, 0
      %p205 = por %p203, %p204
      %s207 = sadd.s32 %s206, 1
      %p210 = scmp.eq.s32.totalorder %s25, 1
      %p211 = scmp.ne.s32.totalorder %s206, %s208
      %p212 = scmp.eq.s32.totalorder %s25, 0
      %p213 = por %p211, %p212
      %p214 = scmp.ne.s32.totalorder %s206, %s208
      %p215 = scmp.eq.s32.totalorder %s30, 1
      %p216 = por %p214, %p215
      %p217 = scmp.ne.s32.totalorder %s208, %s209
      %p218 = scmp.eq.s32.totalorder %s30, 0
      %p219 = por %p217, %p218
      %p220 = scmp.ne.s32.totalorder %s208, %s209
      %p221 = scmp.eq.s32.totalorder %s31, 1
      %p222 = por %p220, %p221
      %p224 = scmp.ne.s32.totalorder %s209, %s223
      %p225 = scmp.eq.s32.totalorder %s31, 0
      %p226 = por %p224, %p225
      %s228 = sadd.s32 %s227, 1
      %p231 = scmp.eq.s32.totalorder %s25, 1
      %p232 = scmp.ne.s32.totalorder %s227, %s229
      %p233 = scmp.eq.s32.totalorder %s25, 0
      %p234 = por %p232, %p233
      %p235 = scmp.ne.s32.totalorder %s227, %s229
      %p236 = scmp.eq.s32.totalorder %s30, 1
      %p237 = por %p235, %p236
      %p238 = scmp.ne.s32.totalorder %s229, %s230
      %p239 = scmp.eq.s32.totalorder %s30, 0
      %p240 = por %p238, %p239
      %p241 = scmp.ne.s32.totalorder %s229, %s230
      %p242 = scmp.eq.s32.totalorder %s31, 1
      %p243 = por %p241, %p242
      %p245 = scmp.ne.s32.totalorder %s230, %s244
      %p246 = scmp.eq.s32.totalorder %s31, 0
      %p247 = por %p245, %p246
      %s249 = sadd.s32 %s248, 1
      %p252 = scmp.eq.s32.totalorder %s25, 1
      %p253 = scmp.ne.s32.totalorder %s248, %s250
      %p254 = scmp.eq.s32.totalorder %s25, 0
      %p255 = por %p253, %p254
      %p256 = scmp.ne.s32.totalorder %s248, %s250
      %p257 = scmp.eq.s32.totalorder %s30, 1
      %p258 = por %p256, %p257
      %p259 = scmp.ne.s32.totalorder %s250, %s251
      %p260 = scmp.eq.s32.totalorder %s30, 0
      %p261 = por %p259, %p260
      %p262 = scmp.ne.s32.totalorder %s250, %s251
      %p263 = scmp.eq.s32.totalorder %s31, 1
      %p264 = por %p262, %p263
      %p266 = scmp.ne.s32.totalorder %s251, %s265
      %p267 = scmp.eq.s32.totalorder %s31, 0
      %p268 = por %p266, %p267
      %s270 = sadd.s32 %s269, 1
      %p273 = scmp.eq.s32.totalorder %s25, 1
      %p274 = scmp.ne.s32.totalorder %s269, %s271
      %p275 = scmp.eq.s32.totalorder %s25, 0
      %p276 = por %p274, %p275
      %p277 = scmp.ne.s32.totalorder %s269, %s271
      %p278 = scmp.eq.s32.totalorder %s30, 1
      %p279 = por %p277, %p278
      %p280 = scmp.ne.s32.totalorder %s271, %s272
      %p281 = scmp.eq.s32.totalorder %s30, 0
      %p282 = por %p280, %p281
      %p283 = scmp.ne.s32.totalorder %s271, %s272
      %p284 = scmp.eq.s32.totalorder %s31, 1
      %p285 = por %p283, %p284
      %p287 = scmp.ne.s32.totalorder %s272, %s286
      %p288 = scmp.eq.s32.totalorder %s31, 0
      %p289 = por %p287, %p288
      %s291 = sadd.s32 %s290, 1
      %p294 = scmp.eq.s32.totalorder %s25, 1
      %p295 = scmp.ne.s32.totalorder %s290, %s292
      %p296 = scmp.eq.s32.totalorder %s25, 0
      %p297 = por %p295, %p296
      %p298 = scmp.ne.s32.totalorder %s290, %s292
      %p299 = scmp.eq.s32.totalorder %s30, 1
      %p300 = por %p298, %p299
      %p301 = scmp.ne.s32.totalorder %s292, %s293
      %p302 = scmp.eq.s32.totalorder %s30, 0
      %p303 = por %p301, %p302
      %p304 = scmp.ne.s32.totalorder %s292, %s293
      %p305 = scmp.eq.s32.totalorder %s31, 1
      %p306 = por %p304, %p305
      %p308 = scmp.ne.s32.totalorder %s293, %s307
      %p309 = scmp.eq.s32.totalorder %s31, 0
      %p310 = por %p308, %p309
      %s311 = ssub.s32 %s25, %s32
      %p312 = scmp.eq.s32.totalorder %s311, 0
      %s314 = sadd.s32 %s313, 1
      %s315 = scalar_select %p312, %s313, %s314
      %p318 = pneg %p312
      %p319 = scmp.eq.s32.totalorder %s25, 1
      %p320 = por %p318, %p319
      %p321 = scmp.ne.s32.totalorder %s313, %s316
      %p322 = scmp.eq.s32.totalorder %s25, 0
      %p323 = por %p321, %p322
      %p324 = scmp.ne.s32.totalorder %s313, %s316
      %p325 = scmp.eq.s32.totalorder %s30, 1
      %p326 = por %p324, %p325
      %p327 = scmp.ne.s32.totalorder %s316, %s317
      %p328 = scmp.eq.s32.totalorder %s30, 0
      %p329 = por %p327, %p328
      %p330 = scmp.ne.s32.totalorder %s316, %s317
      %p331 = scmp.eq.s32.totalorder %s31, 1
      %p332 = por %p330, %p331
      %p334 = scmp.ne.s32.totalorder %s317, %s333
      %p335 = scmp.eq.s32.totalorder %s31, 0
      %p336 = por %p334, %p335
      %p337 = scmp.le.s32.totalorder 1, %s25
      %p338 = scmp.lt.s32.totalorder %s25, 3
      %p339 = pnand %p337, %p338
      %p340 = pneg %p339
      // Predicated region
      $region9: #{tpu_custom_call.1} parent=5 // pred_check
        _
      $region10: #{tpu_custom_call.1} parent=5 // pred_check_branch
        %342 = sbr.rel (%p339) target = $region12
      $region11: #{tpu_custom_call.1} parent=5 // pred_region
        %s343 = ssub.s32 %s25, 1
        // Predicated region
        $region13: #{tpu_custom_call.1} parent=11 // pred_check
          %p344 = pneg %p72
        $region14: #{tpu_custom_call.1} parent=11 // pred_check_branch
          %346 = sbr.rel (%p344) target = $region16
        $region15: #{tpu_custom_call.1} parent=11 // pred_region
          %348 = vsyncadd [#allocation3], 0
          %s350 = sshll.u32 %s1, 4
          %s351 = int_to_ptr.hbm [resolvable:$true] %s350
          %s352 = sshll.u32 [#allocation2], 4
          %s353 = int_to_ptr.vmem [resolvable:$true] %s352
          %355 = dma.hbm_to_vmem [thread:$0]  %s351, 16, %s353, [#allocation3]
        $region16: #{tpu_custom_call.1} parent=11 // pred_fallthru
          _
        // Predicated region
        $region17: #{tpu_custom_call.1} parent=11 // pred_check
          %p356 = pneg %p93
        $region18: #{tpu_custom_call.1} parent=11 // pred_check_branch
          %358 = sbr.rel (%p356) target = $region20
        $region19: #{tpu_custom_call.1} parent=11 // pred_region
          %360 = vsyncadd [#allocation6], 0
          %s362 = sshll.u32 %s2, 4
          %s363 = int_to_ptr.hbm [resolvable:$true] %s362
          %s364 = sshll.u32 [#allocation5], 4
          %s365 = int_to_ptr.vmem [resolvable:$true] %s364
          %367 = dma.hbm_to_vmem [thread:$0]  %s363, 16, %s365, [#allocation6]
        $region20: #{tpu_custom_call.1} parent=11 // pred_fallthru
          _
        // Predicated region
        $region21: #{tpu_custom_call.1} parent=11 // pred_check
          %p368 = pneg %p114
        $region22: #{tpu_custom_call.1} parent=11 // pred_check_branch
          %370 = sbr.rel (%p368) target = $region24
        $region23: #{tpu_custom_call.1} parent=11 // pred_region
          _
        $region24: #{tpu_custom_call.1} parent=11 // pred_fallthru
          _
        // Predicated region
        $region25: #{tpu_custom_call.1} parent=11 // pred_check
          %p371 = pneg %p135
        $region26: #{tpu_custom_call.1} parent=11 // pred_check_branch
          %373 = sbr.rel (%p371) target = $region28
        $region27: #{tpu_custom_call.1} parent=11 // pred_region
          _
        $region28: #{tpu_custom_call.1} parent=11 // pred_fallthru
          _
        // Predicated region
        $region29: #{tpu_custom_call.1} parent=11 // pred_check
          %p374 = pneg %p156
        $region30: #{tpu_custom_call.1} parent=11 // pred_check_branch
          %376 = sbr.rel (%p374) target = $region32
        $region31: #{tpu_custom_call.1} parent=11 // pred_region
          _
        $region32: #{tpu_custom_call.1} parent=11 // pred_fallthru
          _
        // Predicated region
        $region33: #{tpu_custom_call.1} parent=11 // pred_check
          %p377 = pneg %p177
        $region34: #{tpu_custom_call.1} parent=11 // pred_check_branch
          %379 = sbr.rel (%p377) target = $region36
        $region35: #{tpu_custom_call.1} parent=11 // pred_region
          _
        $region36: #{tpu_custom_call.1} parent=11 // pred_fallthru
          _
        // Predicated region
        $region37: #{tpu_custom_call.1} parent=11 // pred_check
          %p380 = pneg %p198
        $region38: #{tpu_custom_call.1} parent=11 // pred_check_branch
          %382 = sbr.rel (%p380) target = $region40
        $region39: #{tpu_custom_call.1} parent=11 // pred_region
          %384 = vsyncadd [#allocation6], 0
          %s386 = sshll.u32 %s7, 4
          %s387 = int_to_ptr.hbm [resolvable:$true] %s386
          %s388 = sshll.u32 [#allocation7], 4
          %s389 = int_to_ptr.vmem [resolvable:$true] %s388
          %391 = dma.hbm_to_vmem [thread:$0]  %s387, 16, %s389, [#allocation6]
        $region40: #{tpu_custom_call.1} parent=11 // pred_fallthru
          _
        // Predicated region
        $region41: #{tpu_custom_call.1} parent=11 // pred_check
          %p392 = pneg %p219
        $region42: #{tpu_custom_call.1} parent=11 // pred_check_branch
          %394 = sbr.rel (%p392) target = $region44
        $region43: #{tpu_custom_call.1} parent=11 // pred_region
          %396 = vsyncadd [#allocation9], 0
          %s398 = sshll.u32 %s8, 4
          %s399 = int_to_ptr.hbm [resolvable:$true] %s398
          %s400 = sshll.u32 [#allocation8], 4
          %s401 = int_to_ptr.vmem [resolvable:$true] %s400
          %403 = dma.hbm_to_vmem [thread:$0]  %s399, 16, %s401, [#allocation9]
        $region44: #{tpu_custom_call.1} parent=11 // pred_fallthru
          _
        // Predicated region
        $region45: #{tpu_custom_call.1} parent=11 // pred_check
          %p404 = pneg %p240
        $region46: #{tpu_custom_call.1} parent=11 // pred_check_branch
          %406 = sbr.rel (%p404) target = $region48
        $region47: #{tpu_custom_call.1} parent=11 // pred_region
          _
        $region48: #{tpu_custom_call.1} parent=11 // pred_fallthru
          _
        // Predicated region
        $region49: #{tpu_custom_call.1} parent=11 // pred_check
          %p407 = pneg %p261
        $region50: #{tpu_custom_call.1} parent=11 // pred_check_branch
          %409 = sbr.rel (%p407) target = $region52
        $region51: #{tpu_custom_call.1} parent=11 // pred_region
          _
        $region52: #{tpu_custom_call.1} parent=11 // pred_fallthru
          _
        // Predicated region
        $region53: #{tpu_custom_call.1} parent=11 // pred_check
          %p410 = pneg %p282
        $region54: #{tpu_custom_call.1} parent=11 // pred_check_branch
          %412 = sbr.rel (%p410) target = $region56
        $region55: #{tpu_custom_call.1} parent=11 // pred_region
          _
        $region56: #{tpu_custom_call.1} parent=11 // pred_fallthru
          _
        // Predicated region
        $region57: #{tpu_custom_call.1} parent=11 // pred_check
          %p413 = pneg %p303
        $region58: #{tpu_custom_call.1} parent=11 // pred_check_branch
          %415 = sbr.rel (%p413) target = $region60
        $region59: #{tpu_custom_call.1} parent=11 // pred_region
          _
        $region60: #{tpu_custom_call.1} parent=11 // pred_fallthru
          _
      $region12: #{tpu_custom_call.1} parent=5 // pred_fallthru
        _
      %p416 = scmp.lt.s32.totalorder %s25, 2
      // Predicated region
      $region61: #{tpu_custom_call.1} parent=5 // pred_check
        %p417 = pneg %p416
      $region62: #{tpu_custom_call.1} parent=5 // pred_check_branch
        %419 = sbr.rel (%p417) target = $region64
      $region63: #{tpu_custom_call.1} parent=5 // pred_region
        // Predicated region
        $region65: #{tpu_custom_call.1} parent=63 // pred_check
          %p420 = pneg %p45
        $region66: #{tpu_custom_call.1} parent=63 // pred_check_branch
          %422 = sbr.rel (%p420) target = $region68
        $region67: #{tpu_custom_call.1} parent=63 // pred_region
          %p423 = scmp.lt.s32.totalorder %s25, 1
          %s424 = scalar_select %p423, %s25, 1
          %s425 = smul.addr %s424, 2
          %s426 = smul.addr %s425, 8
          %s427 = scalar_lea.vmem %s0, %s426
        $region68: #{tpu_custom_call.1} parent=63 // pred_fallthru
          _
      $region64: #{tpu_custom_call.1} parent=5 // pred_fallthru
        _
      %p428 = scmp.le.s32.totalorder 1, %s25
      %p429 = scmp.lt.s32.totalorder %s25, 3
      %p430 = pnand %p428, %p429
      %p431 = pneg %p430
      // Predicated region
      $region69: #{tpu_custom_call.1} parent=5 // pred_check
        _
      $region70: #{tpu_custom_call.1} parent=5 // pred_check_branch
        %433 = sbr.rel (%p430) target = $region72
      $region71: #{tpu_custom_call.1} parent=5 // pred_region
        %s434 = ssub.s32 %s25, 1
        // Predicated region
        $region73: #{tpu_custom_call.1} parent=71 // pred_check
          %p435 = pneg %p72
        $region74: #{tpu_custom_call.1} parent=71 // pred_check_branch
          %437 = sbr.rel (%p435) target = $region76
        $region75: #{tpu_custom_call.1} parent=71 // pred_region
          %439 = dma.done [#allocation3], 16
        $region76: #{tpu_custom_call.1} parent=71 // pred_fallthru
          _
        // Predicated region
        $region77: #{tpu_custom_call.1} parent=71 // pred_check
          %p440 = pneg %p93
        $region78: #{tpu_custom_call.1} parent=71 // pred_check_branch
          %442 = sbr.rel (%p440) target = $region80
        $region79: #{tpu_custom_call.1} parent=71 // pred_region
          %444 = dma.done [#allocation6], 16
        $region80: #{tpu_custom_call.1} parent=71 // pred_fallthru
          _
        // Predicated region
        $region81: #{tpu_custom_call.1} parent=71 // pred_check
          %p445 = pneg %p198
        $region82: #{tpu_custom_call.1} parent=71 // pred_check_branch
          %447 = sbr.rel (%p445) target = $region84
        $region83: #{tpu_custom_call.1} parent=71 // pred_region
          %449 = dma.done [#allocation6], 16
        $region84: #{tpu_custom_call.1} parent=71 // pred_fallthru
          _
        // Predicated region
        $region85: #{tpu_custom_call.1} parent=71 // pred_check
          %p450 = pneg %p219
        $region86: #{tpu_custom_call.1} parent=71 // pred_check_branch
          %452 = sbr.rel (%p450) target = $region88
        $region87: #{tpu_custom_call.1} parent=71 // pred_region
          %454 = dma.done [#allocation9], 16
        $region88: #{tpu_custom_call.1} parent=71 // pred_fallthru
          _
        %p455 = scmp.lt.s32.totalorder %s30, 1
        %s456 = scalar_select %p455, %s30, 1
        %s457 = smul.addr %s456, 2
        %s458 = smul.addr %s457, 8
        %s459 = scalar_lea.vmem %s0, %s458
        %p460 = pneg %p51
        %p461 = pneg %p48
        %p462 = pneg %p72
        %p463 = pneg %p69
        %p464 = pneg %p93
        %p465 = pneg %p90
        %p466 = pneg %p114
        %p467 = pneg %p111
        %p468 = pneg %p135
        %p469 = pneg %p132
        %p470 = pneg %p156
        %p471 = pneg %p153
        %p472 = pneg %p177
        %p473 = pneg %p174
        %p474 = pneg %p198
        %p475 = pneg %p195
        %p476 = pneg %p219
        %p477 = pneg %p216
        %p478 = pneg %p240
        %p479 = pneg %p237
        %p480 = pneg %p261
        %p481 = pneg %p258
        %p482 = pneg %p282
        %p483 = pneg %p279
        %p484 = pneg %p303
        %p485 = pneg %p300
        %p486 = pneg %p329
        %p487 = pneg %p326
        %s488 = sand.u32 %s316, 1
        %s489 = scalar_lea.sflag [#allocation4], %s488
        %s490 = sand.u32 %s316, 1
        %s491 = smul.addr %s490, 16
        %s492 = scalar_lea.vmem [#allocation10], %s491
        %p493 = scmp.lt.s32.totalorder %s30, 1
        %s494 = scalar_select %p493, %s30, 1
        %s495 = smul.addr %s494, 2
        %s496 = smul.addr %s495, 8
        %s497 = scalar_lea.vmem %s0, %s496
        %v499 = vld [vmem:[%s497] sm:$0xff]
        %v500 = vld [vmem:[%s497 + $0x8] sm:$0xff]
        %v501 = vld [vmem:[#allocation2] sm:$0x1]
        %v502 = vld [vmem:[#allocation5] sm:$0x1]
        %vm503 = vcmask 523264
        %v504 = vsel %vm503, %v499, 0.0
        %505 = vadd.xlane.f32.xlu0 %v504
        %v506 = vpop.xlane.xlu0 %505
        %v507 = vsel %vm503, %v500, 0.0
        %508 = vadd.xlane.f32.xlu0 %v507
        %v509 = vpop.xlane.xlu0 %508
        %v510 = vrcp.pop 64.0
        %v511 = vmul.f32 64.0, %v510
        %v512 = vsub.f32 1.0, %v511
        %v513 = vmul.f32 %v510, %v512
        %v514 = vadd.f32 %v510, %v513
        %vm515 = vweird.f32 %v510
        %v516 = vsel %vm515, %v510, %v514
        %v517 = vmul.f32 %v506, %v516
        %v518 = vmul.f32 %v509, %v516
        %v519 = vsub.f32 %v499, %v517
        %v520 = vsub.f32 %v500, %v518
        %v521 = vmul.f32 %v519, %v519
        %v522 = vmul.f32 %v520, %v520
        %v523 = vsel %vm503, %v521, 0.0
        %524 = vadd.xlane.f32.xlu0 %v523
        %v525 = vpop.xlane.xlu0 %524
        %v526 = vsel %vm503, %v522, 0.0
        %527 = vadd.xlane.f32.xlu0 %v526
        %v528 = vpop.xlane.xlu0 %527
        %v529 = vmul.f32 %v525, %v516
        %v530 = vmul.f32 %v528, %v516
        %v531 = vadd.f32 %v529, 1e-05
        %v532 = vadd.f32 %v530, 1e-05
        %v533 = vrsqrt.pop %v531
        %v534 = vmul.f32 %v533, %v531
        %v535 = vmul.f32 %v534, %v533
        %v536 = vmul.f32 0.5, %v535
        %v537 = vsub.f32 1.5, %v536
        %v538 = vmul.f32 %v533, %v537
        %vm539 = vweird.f32 %v531
        %vm540 = vweird.f32 %v533
        %vm541 = vmor %vm539, %vm540
        %v542 = vsel %vm541, %v533, %v538
        %v543 = vrsqrt.pop %v532
        %v544 = vmul.f32 %v543, %v532
        %v545 = vmul.f32 %v544, %v543
        %v546 = vmul.f32 0.5, %v545
        %v547 = vsub.f32 1.5, %v546
        %v548 = vmul.f32 %v543, %v547
        %vm549 = vweird.f32 %v532
        %vm550 = vweird.f32 %v543
        %vm551 = vmor %vm549, %vm550
        %v552 = vsel %vm551, %v543, %v548
        %v553 = vmul.f32 %v519, %v542
        %v554 = vmul.f32 %v520, %v552
        %v556 = vperm.slane %v501, 0
        %v558 = vmul.f32 %v553, %v556
        %v559 = vmul.f32 %v554, %v556
        %v561 = vperm.slane %v502, 0
        %v563 = vadd.f32 %v558, %v561
        %v564 = vadd.f32 %v559, %v561
        %v565 = vld [vmem:[%s3] sm:$0xff]
        %v566 = vld [vmem:[%s3 + $0x8] sm:$0xff]
        %v567 = vld [vmem:[%s3 + $0x10] sm:$0xff]
        %v568 = vld [vmem:[%s3 + $0x18] sm:$0xff]
        %v569 = vld [vmem:[%s3 + $0x20] sm:$0xff]
        %v570 = vld [vmem:[%s3 + $0x28] sm:$0xff]
        %v571 = vld [vmem:[%s3 + $0x30] sm:$0xff]
        %v572 = vld [vmem:[%s3 + $0x38] sm:$0xff]
        %v573 = vpack.c.bf16 %v564, %v563
        %v574 = vld [vmem:[%s4] sm:$0x3]
        %v576 = vperm.slane %v574, 0
        %v577 = vperm.slane %v574, 1
        %v588 = vunpack.c.l.b16 %v565
        %v589 = vunpack.c.h.b16 %v565
        %v590 = vunpack.c.l.b16 %v566
        %v591 = vunpack.c.h.b16 %v566
        %v592 = vunpack.c.l.b16 %v567
        %v593 = vunpack.c.h.b16 %v567
        %v594 = vunpack.c.l.b16 %v568
        %v595 = vunpack.c.h.b16 %v568
        %v596 = vunpack.c.l.b16 %v569
        %v597 = vunpack.c.h.b16 %v569
        %v598 = vunpack.c.l.b16 %v570
        %v599 = vunpack.c.h.b16 %v570
        %v600 = vunpack.c.l.b16 %v571
        %v601 = vunpack.c.h.b16 %v571
        %v602 = vunpack.c.l.b16 %v572
        %v603 = vunpack.c.h.b16 %v572
        %v604 = vpack.c.b16 %v590, %v588
        %v605 = vpack.c.b16 %v591, %v589
        %v606 = vpack.c.b16 %v594, %v592
        %v607 = vpack.c.b16 %v595, %v593
        %v608 = vpack.c.b16 %v598, %v596
        %v609 = vpack.c.b16 %v599, %v597
        %v610 = vpack.c.b16 %v602, %v600
        %v611 = vpack.c.b16 %v603, %v601
        %v621 = vsel %vm503, %v573, 0
        %623 = vmatpush.bf16.msra.mxu0 0
        %624 = vmatpush.bf16.msra.mxu0 0
        %625 = vmatpush.bf16.msra.mxu0 0
        %626 = vmatpush.bf16.msra.mxu0 0
        %627 = vmatpush.bf16.msra.mxu0 %v610
        %628 = vmatpush.bf16.msra.mxu0 %v608
        %629 = vmatpush.bf16.msra.mxu0 %v606
        %630 = vmatpush.bf16.msra.mxu0 %v604
        %631 = vmatmul.bf16.gmra.mxu0 %v621
        %v632 = vpop.f32.mrf.mxu0
        %v633 = vadd.f32 %v576, %v632
        %v634 = vpop.f32.mrf.mxu0
        %v635 = vadd.f32 %v576, %v634
        %636 = vdwg.mxu0
        %637 = vmatpush.bf16.msra.mxu0 0
        %638 = vmatpush.bf16.msra.mxu0 0
        %639 = vmatpush.bf16.msra.mxu0 0
        %640 = vmatpush.bf16.msra.mxu0 0
        %641 = vmatpush.bf16.msra.mxu0 %v611
        %642 = vmatpush.bf16.msra.mxu0 %v609
        %643 = vmatpush.bf16.msra.mxu0 %v607
        %644 = vmatpush.bf16.msra.mxu0 %v605
        %645 = vmatmul.bf16.gmra.mxu0 %v621
        %v646 = vpop.f32.mrf.mxu0
        %v647 = vadd.f32 %v577, %v646
        %v648 = vpop.f32.mrf.mxu0
        %v649 = vadd.f32 %v577, %v648
        %650 = vdwg.mxu0
        %653 = vrot.lane.b32.xlu0 %v633, 112
        %v654 = vpop.permute.xlu0 %653
        %655 = vrot.lane.b32.xlu0 %v635, 112
        %v656 = vpop.permute.xlu0 %655
        %659 = vrot.lane.b32.xlu0 %v633, 96
        %v660 = vpop.permute.xlu0 %659
        %661 = vrot.lane.b32.xlu0 %v635, 96
        %v662 = vpop.permute.xlu0 %661
        %665 = vrot.lane.b32.xlu0 %v633, 80
        %v666 = vpop.permute.xlu0 %665
        %667 = vrot.lane.b32.xlu0 %v635, 80
        %v668 = vpop.permute.xlu0 %667
        %v671 = vrot.slane %v660, 4
        %vm672 = vcmask 1047556
        %v673 = vsel %vm672, %v671, %v633
        %v674 = vrot.slane %v633, 4
        %v675 = vsel %vm672, %v660, %v674
        %v677 = vunpack.c.l.s4 1983009808
        %v678 = vunpack.c.0.s8 %v677
        %v679 = vperm.slane %v673, %v678
        %v681 = vunpack.c.l.s4 1983009808
        %v682 = vunpack.c.0.s8 %v681
        %v683 = vperm.slane %v675, %v682
        %v684 = vrot.slane %v666, 4
        %v685 = vsel %vm672, %v684, %v654
        %v686 = vrot.slane %v654, 4
        %v687 = vsel %vm672, %v666, %v686
        %v689 = vunpack.c.l.s4 1983009808
        %v690 = vunpack.c.0.s8 %v689
        %v691 = vperm.slane %v685, %v690
        %v693 = vunpack.c.l.s4 1983009808
        %v694 = vunpack.c.0.s8 %v693
        %v695 = vperm.slane %v687, %v694
        %v696 = vrot.slane %v691, 4
        %v697 = vsel %vm672, %v696, %v679
        %v698 = vrot.slane %v679, 4
        %v699 = vsel %vm672, %v691, %v698
        %v701 = vunpack.c.l.s4 1934713408
        %v702 = vunpack.c.0.s8 %v701
        %v703 = vperm.slane %v697, %v702
        %v705 = vunpack.c.l.s4 1934713408
        %v706 = vunpack.c.0.s8 %v705
        %v707 = vperm.slane %v699, %v706
        %v708 = vrot.slane %v695, 4
        %v709 = vsel %vm672, %v708, %v683
        %v710 = vrot.slane %v683, 4
        %v711 = vsel %vm672, %v695, %v710
        %v713 = vunpack.c.l.s4 1934713408
        %v714 = vunpack.c.0.s8 %v713
        %v715 = vperm.slane %v709, %v714
        %v717 = vunpack.c.l.s4 1934713408
        %v718 = vunpack.c.0.s8 %v717
        %v719 = vperm.slane %v711, %v718
        %v720 = vrot.slane %v703, 4
        %v721 = vsel %vm672, 0.0, %v720
        %v722 = vrot.slane %v707, 4
        %v723 = vsel %vm672, 0.0, %v722
        %v724 = vrot.slane %v715, 4
        %v725 = vsel %vm672, 0.0, %v724
        %v726 = vrot.slane %v719, 4
        %v727 = vsel %vm672, 0.0, %v726
        %v728 = vrot.slane %v662, 4
        %v729 = vsel %vm672, %v728, %v635
        %v730 = vrot.slane %v635, 4
        %v731 = vsel %vm672, %v662, %v730
        %v733 = vunpack.c.l.s4 1983009808
        %v734 = vunpack.c.0.s8 %v733
        %v735 = vperm.slane %v729, %v734
        %v737 = vunpack.c.l.s4 1983009808
        %v738 = vunpack.c.0.s8 %v737
        %v739 = vperm.slane %v731, %v738
        %v740 = vrot.slane %v668, 4
        %v741 = vsel %vm672, %v740, %v656
        %v742 = vrot.slane %v656, 4
        %v743 = vsel %vm672, %v668, %v742
        %v745 = vunpack.c.l.s4 1983009808
        %v746 = vunpack.c.0.s8 %v745
        %v747 = vperm.slane %v741, %v746
        %v749 = vunpack.c.l.s4 1983009808
        %v750 = vunpack.c.0.s8 %v749
        %v751 = vperm.slane %v743, %v750
        %v752 = vrot.slane %v747, 4
        %v753 = vsel %vm672, %v752, %v735
        %v754 = vrot.slane %v735, 4
        %v755 = vsel %vm672, %v747, %v754
        %v757 = vunpack.c.l.s4 1934713408
        %v758 = vunpack.c.0.s8 %v757
        %v759 = vperm.slane %v753, %v758
        %v761 = vunpack.c.l.s4 1934713408
        %v762 = vunpack.c.0.s8 %v761
        %v763 = vperm.slane %v755, %v762
        %v764 = vrot.slane %v751, 4
        %v765 = vsel %vm672, %v764, %v739
        %v766 = vrot.slane %v739, 4
        %v767 = vsel %vm672, %v751, %v766
        %v769 = vunpack.c.l.s4 1934713408
        %v770 = vunpack.c.0.s8 %v769
        %v771 = vperm.slane %v765, %v770
        %v773 = vunpack.c.l.s4 1934713408
        %v774 = vunpack.c.0.s8 %v773
        %v775 = vperm.slane %v767, %v774
        %v776 = vrot.slane %v759, 4
        %v777 = vsel %vm672, 0.0, %v776
        %v778 = vrot.slane %v763, 4
        %v779 = vsel %vm672, 0.0, %v778
        %v780 = vrot.slane %v771, 4
        %v781 = vsel %vm672, 0.0, %v780
        %v782 = vrot.slane %v775, 4
        %v783 = vsel %vm672, 0.0, %v782
        %v784 = vsel %vm672, %v722, %v703
        %v786 = vunpack.c.l.s4 1983009808
        %v787 = vunpack.c.0.s8 %v786
        %v788 = vperm.slane %v784, %v787
        %v789 = vrot.slane %v723, 4
        %v790 = vsel %vm672, %v789, %v721
        %v792 = vunpack.c.l.s4 1983009808
        %v793 = vunpack.c.0.s8 %v792
        %v794 = vperm.slane %v790, %v793
        %v795 = vsel %vm672, %v726, %v715
        %v797 = vunpack.c.l.s4 1983009808
        %v798 = vunpack.c.0.s8 %v797
        %v799 = vperm.slane %v795, %v798
        %v800 = vrot.slane %v727, 4
        %v801 = vsel %vm672, %v800, %v725
        %v803 = vunpack.c.l.s4 1983009808
        %v804 = vunpack.c.0.s8 %v803
        %v805 = vperm.slane %v801, %v804
        %v806 = vrot.slane %v794, 4
        %v807 = vsel %vm672, %v806, %v788
        %v808 = vrot.slane %v788, 4
        %v809 = vsel %vm672, %v794, %v808
        %v811 = vunpack.c.l.s4 1934713408
        %v812 = vunpack.c.0.s8 %v811
        %v813 = vperm.slane %v807, %v812
        %v815 = vunpack.c.l.s4 1934713408
        %v816 = vunpack.c.0.s8 %v815
        %v817 = vperm.slane %v809, %v816
        %v818 = vrot.slane %v805, 4
        %v819 = vsel %vm672, %v818, %v799
        %v820 = vrot.slane %v799, 4
        %v821 = vsel %vm672, %v805, %v820
        %v823 = vunpack.c.l.s4 1934713408
        %v824 = vunpack.c.0.s8 %v823
        %v825 = vperm.slane %v819, %v824
        %v827 = vunpack.c.l.s4 1934713408
        %v828 = vunpack.c.0.s8 %v827
        %v829 = vperm.slane %v821, %v828
        %v830 = vrot.slane %v825, 4
        %v831 = vsel %vm672, %v830, %v813
        %v832 = vrot.slane %v813, 4
        %v833 = vsel %vm672, %v825, %v832
        %v834 = vrot.slane %v829, 4
        %v835 = vsel %vm672, %v834, %v817
        %v836 = vrot.slane %v817, 4
        %v837 = vsel %vm672, %v829, %v836
        %v838 = vsel %vm672, %v778, %v759
        %v840 = vunpack.c.l.s4 1983009808
        %v841 = vunpack.c.0.s8 %v840
        %v842 = vperm.slane %v838, %v841
        %v843 = vrot.slane %v779, 4
        %v844 = vsel %vm672, %v843, %v777
        %v846 = vunpack.c.l.s4 1983009808
        %v847 = vunpack.c.0.s8 %v846
        %v848 = vperm.slane %v844, %v847
        %v849 = vsel %vm672, %v782, %v771
        %v851 = vunpack.c.l.s4 1983009808
        %v852 = vunpack.c.0.s8 %v851
        %v853 = vperm.slane %v849, %v852
        %v854 = vrot.slane %v783, 4
        %v855 = vsel %vm672, %v854, %v781
        %v857 = vunpack.c.l.s4 1983009808
        %v858 = vunpack.c.0.s8 %v857
        %v859 = vperm.slane %v855, %v858
        %v860 = vrot.slane %v848, 4
        %v861 = vsel %vm672, %v860, %v842
        %v862 = vrot.slane %v842, 4
        %v863 = vsel %vm672, %v848, %v862
        %v865 = vunpack.c.l.s4 1934713408
        %v866 = vunpack.c.0.s8 %v865
        %v867 = vperm.slane %v861, %v866
        %v869 = vunpack.c.l.s4 1934713408
        %v870 = vunpack.c.0.s8 %v869
        %v871 = vperm.slane %v863, %v870
        %v872 = vrot.slane %v859, 4
        %v873 = vsel %vm672, %v872, %v853
        %v874 = vrot.slane %v853, 4
        %v875 = vsel %vm672, %v859, %v874
        %v877 = vunpack.c.l.s4 1934713408
        %v878 = vunpack.c.0.s8 %v877
        %v879 = vperm.slane %v873, %v878
        %v881 = vunpack.c.l.s4 1934713408
        %v882 = vunpack.c.0.s8 %v881
        %v883 = vperm.slane %v875, %v882
        %v884 = vrot.slane %v879, 4
        %v885 = vsel %vm672, %v884, %v867
        %v886 = vrot.slane %v867, 4
        %v887 = vsel %vm672, %v879, %v886
        %v888 = vrot.slane %v883, 4
        %v889 = vsel %vm672, %v888, %v871
        %v890 = vrot.slane %v871, 4
        %v891 = vsel %vm672, %v883, %v890
        %892 = vrot.lane.b32.xlu0 %v633, 64
        %v893 = vpop.permute.xlu0 %892
        %894 = vrot.lane.b32.xlu0 %v635, 64
        %v895 = vpop.permute.xlu0 %894
        %896 = vrot.lane.b32.xlu0 %v654, 64
        %v897 = vpop.permute.xlu0 %896
        %898 = vrot.lane.b32.xlu0 %v656, 64
        %v899 = vpop.permute.xlu0 %898
        %900 = vrot.lane.b32.xlu0 %v660, 64
        %v901 = vpop.permute.xlu0 %900
        %902 = vrot.lane.b32.xlu0 %v662, 64
        %v903 = vpop.permute.xlu0 %902
        %904 = vrot.lane.b32.xlu0 %v666, 64
        %v905 = vpop.permute.xlu0 %904
        %906 = vrot.lane.b32.xlu0 %v668, 64
        %v907 = vpop.permute.xlu0 %906
        %v916 = vrot.slane %v901, 4
        %v917 = vsel %vm672, %v916, %v893
        %v918 = vrot.slane %v893, 4
        %v919 = vsel %vm672, %v901, %v918
        %v921 = vunpack.c.l.s4 1983009808
        %v922 = vunpack.c.0.s8 %v921
        %v923 = vperm.slane %v917, %v922
        %v925 = vunpack.c.l.s4 1983009808
        %v926 = vunpack.c.0.s8 %v925
        %v927 = vperm.slane %v919, %v926
        %v928 = vrot.slane %v905, 4
        %v929 = vsel %vm672, %v928, %v897
        %v930 = vrot.slane %v897, 4
        %v931 = vsel %vm672, %v905, %v930
        %v933 = vunpack.c.l.s4 1983009808
        %v934 = vunpack.c.0.s8 %v933
        %v935 = vperm.slane %v929, %v934
        %v937 = vunpack.c.l.s4 1983009808
        %v938 = vunpack.c.0.s8 %v937
        %v939 = vperm.slane %v931, %v938
        %v940 = vrot.slane %v935, 4
        %v941 = vsel %vm672, %v940, %v923
        %v942 = vrot.slane %v923, 4
        %v943 = vsel %vm672, %v935, %v942
        %v945 = vunpack.c.l.s4 1934713408
        %v946 = vunpack.c.0.s8 %v945
        %v947 = vperm.slane %v941, %v946
        %v949 = vunpack.c.l.s4 1934713408
        %v950 = vunpack.c.0.s8 %v949
        %v951 = vperm.slane %v943, %v950
        %v952 = vrot.slane %v939, 4
        %v953 = vsel %vm672, %v952, %v927
        %v954 = vrot.slane %v927, 4
        %v955 = vsel %vm672, %v939, %v954
        %v957 = vunpack.c.l.s4 1934713408
        %v958 = vunpack.c.0.s8 %v957
        %v959 = vperm.slane %v953, %v958
        %v961 = vunpack.c.l.s4 1934713408
        %v962 = vunpack.c.0.s8 %v961
        %v963 = vperm.slane %v955, %v962
        %v964 = vrot.slane %v947, 4
        %v965 = vsel %vm672, 0.0, %v964
        %v966 = vrot.slane %v951, 4
        %v967 = vsel %vm672, 0.0, %v966
        %v968 = vrot.slane %v959, 4
        %v969 = vsel %vm672, 0.0, %v968
        %v970 = vrot.slane %v963, 4
        %v971 = vsel %vm672, 0.0, %v970
        %v972 = vrot.slane %v903, 4
        %v973 = vsel %vm672, %v972, %v895
        %v974 = vrot.slane %v895, 4
        %v975 = vsel %vm672, %v903, %v974
        %v977 = vunpack.c.l.s4 1983009808
        %v978 = vunpack.c.0.s8 %v977
        %v979 = vperm.slane %v973, %v978
        %v981 = vunpack.c.l.s4 1983009808
        %v982 = vunpack.c.0.s8 %v981
        %v983 = vperm.slane %v975, %v982
        %v984 = vrot.slane %v907, 4
        %v985 = vsel %vm672, %v984, %v899
        %v986 = vrot.slane %v899, 4
        %v987 = vsel %vm672, %v907, %v986
        %v989 = vunpack.c.l.s4 1983009808
        %v990 = vunpack.c.0.s8 %v989
        %v991 = vperm.slane %v985, %v990
        %v993 = vunpack.c.l.s4 1983009808
        %v994 = vunpack.c.0.s8 %v993
        %v995 = vperm.slane %v987, %v994
        %v996 = vrot.slane %v991, 4
        %v997 = vsel %vm672, %v996, %v979
        %v998 = vrot.slane %v979, 4
        %v999 = vsel %vm672, %v991, %v998
        %v1001 = vunpack.c.l.s4 1934713408
        %v1002 = vunpack.c.0.s8 %v1001
        %v1003 = vperm.slane %v997, %v1002
        %v1005 = vunpack.c.l.s4 1934713408
        %v1006 = vunpack.c.0.s8 %v1005
        %v1007 = vperm.slane %v999, %v1006
        %v1008 = vrot.slane %v995, 4
        %v1009 = vsel %vm672, %v1008, %v983
        %v1010 = vrot.slane %v983, 4
        %v1011 = vsel %vm672, %v995, %v1010
        %v1013 = vunpack.c.l.s4 1934713408
        %v1014 = vunpack.c.0.s8 %v1013
        %v1015 = vperm.slane %v1009, %v1014
        %v1017 = vunpack.c.l.s4 1934713408
        %v1018 = vunpack.c.0.s8 %v1017
        %v1019 = vperm.slane %v1011, %v1018
        %v1020 = vrot.slane %v1003, 4
        %v1021 = vsel %vm672, 0.0, %v1020
        %v1022 = vrot.slane %v1007, 4
        %v1023 = vsel %vm672, 0.0, %v1022
        %v1024 = vrot.slane %v1015, 4
        %v1025 = vsel %vm672, 0.0, %v1024
        %v1026 = vrot.slane %v1019, 4
        %v1027 = vsel %vm672, 0.0, %v1026
        %v1028 = vsel %vm672, %v966, %v947
        %v1030 = vunpack.c.l.s4 1983009808
        %v1031 = vunpack.c.0.s8 %v1030
        %v1032 = vperm.slane %v1028, %v1031
        %v1033 = vrot.slane %v967, 4
        %v1034 = vsel %vm672, %v1033, %v965
        %v1036 = vunpack.c.l.s4 1983009808
        %v1037 = vunpack.c.0.s8 %v1036
        %v1038 = vperm.slane %v1034, %v1037
        %v1039 = vsel %vm672, %v970, %v959
        %v1041 = vunpack.c.l.s4 1983009808
        %v1042 = vunpack.c.0.s8 %v1041
        %v1043 = vperm.slane %v1039, %v1042
        %v1044 = vrot.slane %v971, 4
        %v1045 = vsel %vm672, %v1044, %v969
        %v1047 = vunpack.c.l.s4 1983009808
        %v1048 = vunpack.c.0.s8 %v1047
        %v1049 = vperm.slane %v1045, %v1048
        %v1050 = vrot.slane %v1038, 4
        %v1051 = vsel %vm672, %v1050, %v1032
        %v1052 = vrot.slane %v1032, 4
        %v1053 = vsel %vm672, %v1038, %v1052
        %v1055 = vunpack.c.l.s4 1934713408
        %v1056 = vunpack.c.0.s8 %v1055
        %v1057 = vperm.slane %v1051, %v1056
        %v1059 = vunpack.c.l.s4 1934713408
        %v1060 = vunpack.c.0.s8 %v1059
        %v1061 = vperm.slane %v1053, %v1060
        %v1062 = vrot.slane %v1049, 4
        %v1063 = vsel %vm672, %v1062, %v1043
        %v1064 = vrot.slane %v1043, 4
        %v1065 = vsel %vm672, %v1049, %v1064
        %v1067 = vunpack.c.l.s4 1934713408
        %v1068 = vunpack.c.0.s8 %v1067
        %v1069 = vperm.slane %v1063, %v1068
        %v1071 = vunpack.c.l.s4 1934713408
        %v1072 = vunpack.c.0.s8 %v1071
        %v1073 = vperm.slane %v1065, %v1072
        %v1074 = vrot.slane %v1069, 4
        %v1075 = vsel %vm672, %v1074, %v1057
        %v1076 = vrot.slane %v1057, 4
        %v1077 = vsel %vm672, %v1069, %v1076
        %v1078 = vrot.slane %v1073, 4
        %v1079 = vsel %vm672, %v1078, %v1061
        %v1080 = vrot.slane %v1061, 4
        %v1081 = vsel %vm672, %v1073, %v1080
        %v1082 = vsel %vm672, %v1022, %v1003
        %v1084 = vunpack.c.l.s4 1983009808
        %v1085 = vunpack.c.0.s8 %v1084
        %v1086 = vperm.slane %v1082, %v1085
        %v1087 = vrot.slane %v1023, 4
        %v1088 = vsel %vm672, %v1087, %v1021
        %v1090 = vunpack.c.l.s4 1983009808
        %v1091 = vunpack.c.0.s8 %v1090
        %v1092 = vperm.slane %v1088, %v1091
        %v1093 = vsel %vm672, %v1026, %v1015
        %v1095 = vunpack.c.l.s4 1983009808
        %v1096 = vunpack.c.0.s8 %v1095
        %v1097 = vperm.slane %v1093, %v1096
        %v1098 = vrot.slane %v1027, 4
        %v1099 = vsel %vm672, %v1098, %v1025
        %v1101 = vunpack.c.l.s4 1983009808
        %v1102 = vunpack.c.0.s8 %v1101
        %v1103 = vperm.slane %v1099, %v1102
        %v1104 = vrot.slane %v1092, 4
        %v1105 = vsel %vm672, %v1104, %v1086
        %v1106 = vrot.slane %v1086, 4
        %v1107 = vsel %vm672, %v1092, %v1106
        %v1109 = vunpack.c.l.s4 1934713408
        %v1110 = vunpack.c.0.s8 %v1109
        %v1111 = vperm.slane %v1105, %v1110
        %v1113 = vunpack.c.l.s4 1934713408
        %v1114 = vunpack.c.0.s8 %v1113
        %v1115 = vperm.slane %v1107, %v1114
        %v1116 = vrot.slane %v1103, 4
        %v1117 = vsel %vm672, %v1116, %v1097
        %v1118 = vrot.slane %v1097, 4
        %v1119 = vsel %vm672, %v1103, %v1118
        %v1121 = vunpack.c.l.s4 1934713408
        %v1122 = vunpack.c.0.s8 %v1121
        %v1123 = vperm.slane %v1117, %v1122
        %v1125 = vunpack.c.l.s4 1934713408
        %v1126 = vunpack.c.0.s8 %v1125
        %v1127 = vperm.slane %v1119, %v1126
        %v1128 = vrot.slane %v1123, 4
        %v1129 = vsel %vm672, %v1128, %v1111
        %v1130 = vrot.slane %v1111, 4
        %v1131 = vsel %vm672, %v1123, %v1130
        %v1132 = vrot.slane %v1127, 4
        %v1133 = vsel %vm672, %v1132, %v1115
        %v1134 = vrot.slane %v1115, 4
        %v1135 = vsel %vm672, %v1127, %v1134
        %1138 = vrot.lane.b32.xlu0 %v647, 112
        %v1139 = vpop.permute.xlu0 %1138
        %1140 = vrot.lane.b32.xlu0 %v649, 112
        %v1141 = vpop.permute.xlu0 %1140
        %1144 = vrot.lane.b32.xlu0 %v647, 96
        %v1145 = vpop.permute.xlu0 %1144
        %1146 = vrot.lane.b32.xlu0 %v649, 96
        %v1147 = vpop.permute.xlu0 %1146
        %1150 = vrot.lane.b32.xlu0 %v647, 80
        %v1151 = vpop.permute.xlu0 %1150
        %1152 = vrot.lane.b32.xlu0 %v649, 80
        %v1153 = vpop.permute.xlu0 %1152
        %v1156 = vrot.slane %v1145, 4
        %v1157 = vsel %vm672, %v1156, %v647
        %v1158 = vrot.slane %v647, 4
        %v1159 = vsel %vm672, %v1145, %v1158
        %v1161 = vunpack.c.l.s4 1983009808
        %v1162 = vunpack.c.0.s8 %v1161
        %v1163 = vperm.slane %v1157, %v1162
        %v1165 = vunpack.c.l.s4 1983009808
        %v1166 = vunpack.c.0.s8 %v1165
        %v1167 = vperm.slane %v1159, %v1166
        %v1168 = vrot.slane %v1151, 4
        %v1169 = vsel %vm672, %v1168, %v1139
        %v1170 = vrot.slane %v1139, 4
        %v1171 = vsel %vm672, %v1151, %v1170
        %v1173 = vunpack.c.l.s4 1983009808
        %v1174 = vunpack.c.0.s8 %v1173
        %v1175 = vperm.slane %v1169, %v1174
        %v1177 = vunpack.c.l.s4 1983009808
        %v1178 = vunpack.c.0.s8 %v1177
        %v1179 = vperm.slane %v1171, %v1178
        %v1180 = vrot.slane %v1175, 4
        %v1181 = vsel %vm672, %v1180, %v1163
        %v1182 = vrot.slane %v1163, 4
        %v1183 = vsel %vm672, %v1175, %v1182
        %v1185 = vunpack.c.l.s4 1934713408
        %v1186 = vunpack.c.0.s8 %v1185
        %v1187 = vperm.slane %v1181, %v1186
        %v1189 = vunpack.c.l.s4 1934713408
        %v1190 = vunpack.c.0.s8 %v1189
        %v1191 = vperm.slane %v1183, %v1190
        %v1192 = vrot.slane %v1179, 4
        %v1193 = vsel %vm672, %v1192, %v1167
        %v1194 = vrot.slane %v1167, 4
        %v1195 = vsel %vm672, %v1179, %v1194
        %v1197 = vunpack.c.l.s4 1934713408
        %v1198 = vunpack.c.0.s8 %v1197
        %v1199 = vperm.slane %v1193, %v1198
        %v1201 = vunpack.c.l.s4 1934713408
        %v1202 = vunpack.c.0.s8 %v1201
        %v1203 = vperm.slane %v1195, %v1202
        %v1204 = vrot.slane %v1187, 4
        %v1205 = vsel %vm672, 0.0, %v1204
        %v1206 = vrot.slane %v1191, 4
        %v1207 = vsel %vm672, 0.0, %v1206
        %v1208 = vrot.slane %v1199, 4
        %v1209 = vsel %vm672, 0.0, %v1208
        %v1210 = vrot.slane %v1203, 4
        %v1211 = vsel %vm672, 0.0, %v1210
        %v1212 = vrot.slane %v1147, 4
        %v1213 = vsel %vm672, %v1212, %v649
        %v1214 = vrot.slane %v649, 4
        %v1215 = vsel %vm672, %v1147, %v1214
        %v1217 = vunpack.c.l.s4 1983009808
        %v1218 = vunpack.c.0.s8 %v1217
        %v1219 = vperm.slane %v1213, %v1218
        %v1221 = vunpack.c.l.s4 1983009808
        %v1222 = vunpack.c.0.s8 %v1221
        %v1223 = vperm.slane %v1215, %v1222
        %v1224 = vrot.slane %v1153, 4
        %v1225 = vsel %vm672, %v1224, %v1141
        %v1226 = vrot.slane %v1141, 4
        %v1227 = vsel %vm672, %v1153, %v1226
        %v1229 = vunpack.c.l.s4 1983009808
        %v1230 = vunpack.c.0.s8 %v1229
        %v1231 = vperm.slane %v1225, %v1230
        %v1233 = vunpack.c.l.s4 1983009808
        %v1234 = vunpack.c.0.s8 %v1233
        %v1235 = vperm.slane %v1227, %v1234
        %v1236 = vrot.slane %v1231, 4
        %v1237 = vsel %vm672, %v1236, %v1219
        %v1238 = vrot.slane %v1219, 4
        %v1239 = vsel %vm672, %v1231, %v1238
        %v1241 = vunpack.c.l.s4 1934713408
        %v1242 = vunpack.c.0.s8 %v1241
        %v1243 = vperm.slane %v1237, %v1242
        %v1245 = vunpack.c.l.s4 1934713408
        %v1246 = vunpack.c.0.s8 %v1245
        %v1247 = vperm.slane %v1239, %v1246
        %v1248 = vrot.slane %v1235, 4
        %v1249 = vsel %vm672, %v1248, %v1223
        %v1250 = vrot.slane %v1223, 4
        %v1251 = vsel %vm672, %v1235, %v1250
        %v1253 = vunpack.c.l.s4 1934713408
        %v1254 = vunpack.c.0.s8 %v1253
        %v1255 = vperm.slane %v1249, %v1254
        %v1257 = vunpack.c.l.s4 1934713408
        %v1258 = vunpack.c.0.s8 %v1257
        %v1259 = vperm.slane %v1251, %v1258
        %v1260 = vrot.slane %v1243, 4
        %v1261 = vsel %vm672, 0.0, %v1260
        %v1262 = vrot.slane %v1247, 4
        %v1263 = vsel %vm672, 0.0, %v1262
        %v1264 = vrot.slane %v1255, 4
        %v1265 = vsel %vm672, 0.0, %v1264
        %v1266 = vrot.slane %v1259, 4
        %v1267 = vsel %vm672, 0.0, %v1266
        %v1268 = vsel %vm672, %v1206, %v1187
        %v1270 = vunpack.c.l.s4 1983009808
        %v1271 = vunpack.c.0.s8 %v1270
        %v1272 = vperm.slane %v1268, %v1271
        %v1273 = vrot.slane %v1207, 4
        %v1274 = vsel %vm672, %v1273, %v1205
        %v1276 = vunpack.c.l.s4 1983009808
        %v1277 = vunpack.c.0.s8 %v1276
        %v1278 = vperm.slane %v1274, %v1277
        %v1279 = vsel %vm672, %v1210, %v1199
        %v1281 = vunpack.c.l.s4 1983009808
        %v1282 = vunpack.c.0.s8 %v1281
        %v1283 = vperm.slane %v1279, %v1282
        %v1284 = vrot.slane %v1211, 4
        %v1285 = vsel %vm672, %v1284, %v1209
        %v1287 = vunpack.c.l.s4 1983009808
        %v1288 = vunpack.c.0.s8 %v1287
        %v1289 = vperm.slane %v1285, %v1288
        %v1290 = vrot.slane %v1278, 4
        %v1291 = vsel %vm672, %v1290, %v1272
        %v1292 = vrot.slane %v1272, 4
        %v1293 = vsel %vm672, %v1278, %v1292
        %v1295 = vunpack.c.l.s4 1934713408
        %v1296 = vunpack.c.0.s8 %v1295
        %v1297 = vperm.slane %v1291, %v1296
        %v1299 = vunpack.c.l.s4 1934713408
        %v1300 = vunpack.c.0.s8 %v1299
        %v1301 = vperm.slane %v1293, %v1300
        %v1302 = vrot.slane %v1289, 4
        %v1303 = vsel %vm672, %v1302, %v1283
        %v1304 = vrot.slane %v1283, 4
        %v1305 = vsel %vm672, %v1289, %v1304
        %v1307 = vunpack.c.l.s4 1934713408
        %v1308 = vunpack.c.0.s8 %v1307
        %v1309 = vperm.slane %v1303, %v1308
        %v1311 = vunpack.c.l.s4 1934713408
        %v1312 = vunpack.c.0.s8 %v1311
        %v1313 = vperm.slane %v1305, %v1312
        %v1314 = vrot.slane %v1309, 4
        %v1315 = vsel %vm672, %v1314, %v1297
        %v1316 = vrot.slane %v1297, 4
        %v1317 = vsel %vm672, %v1309, %v1316
        %v1318 = vrot.slane %v1313, 4
        %v1319 = vsel %vm672, %v1318, %v1301
        %v1320 = vrot.slane %v1301, 4
        %v1321 = vsel %vm672, %v1313, %v1320
        %v1322 = vsel %vm672, %v1262, %v1243
        %v1324 = vunpack.c.l.s4 1983009808
        %v1325 = vunpack.c.0.s8 %v1324
        %v1326 = vperm.slane %v1322, %v1325
        %v1327 = vrot.slane %v1263, 4
        %v1328 = vsel %vm672, %v1327, %v1261
        %v1330 = vunpack.c.l.s4 1983009808
        %v1331 = vunpack.c.0.s8 %v1330
        %v1332 = vperm.slane %v1328, %v1331
        %v1333 = vsel %vm672, %v1266, %v1255
        %v1335 = vunpack.c.l.s4 1983009808
        %v1336 = vunpack.c.0.s8 %v1335
        %v1337 = vperm.slane %v1333, %v1336
        %v1338 = vrot.slane %v1267, 4
        %v1339 = vsel %vm672, %v1338, %v1265
        %v1341 = vunpack.c.l.s4 1983009808
        %v1342 = vunpack.c.0.s8 %v1341
        %v1343 = vperm.slane %v1339, %v1342
        %v1344 = vrot.slane %v1332, 4
        %v1345 = vsel %vm672, %v1344, %v1326
        %v1346 = vrot.slane %v1326, 4
        %v1347 = vsel %vm672, %v1332, %v1346
        %v1349 = vunpack.c.l.s4 1934713408
        %v1350 = vunpack.c.0.s8 %v1349
        %v1351 = vperm.slane %v1345, %v1350
        %v1353 = vunpack.c.l.s4 1934713408
        %v1354 = vunpack.c.0.s8 %v1353
        %v1355 = vperm.slane %v1347, %v1354
        %v1356 = vrot.slane %v1343, 4
        %v1357 = vsel %vm672, %v1356, %v1337
        %v1358 = vrot.slane %v1337, 4
        %v1359 = vsel %vm672, %v1343, %v1358
        %v1361 = vunpack.c.l.s4 1934713408
        %v1362 = vunpack.c.0.s8 %v1361
        %v1363 = vperm.slane %v1357, %v1362
        %v1365 = vunpack.c.l.s4 1934713408
        %v1366 = vunpack.c.0.s8 %v1365
        %v1367 = vperm.slane %v1359, %v1366
        %v1368 = vrot.slane %v1363, 4
        %v1369 = vsel %vm672, %v1368, %v1351
        %v1370 = vrot.slane %v1351, 4
        %v1371 = vsel %vm672, %v1363, %v1370
        %v1372 = vrot.slane %v1367, 4
        %v1373 = vsel %vm672, %v1372, %v1355
        %v1374 = vrot.slane %v1355, 4
        %v1375 = vsel %vm672, %v1367, %v1374
        %v1376 = vpack.c.bf16 %v831, %v831
        %v1377 = vpack.c.bf16 %v885, %v885
        %v1378 = vpack.c.bf16 %v833, %v833
        %v1379 = vpack.c.bf16 %v887, %v887
        %v1380 = vpack.c.bf16 %v835, %v835
        %v1381 = vpack.c.bf16 %v889, %v889
        %v1382 = vpack.c.bf16 %v837, %v837
        %v1383 = vpack.c.bf16 %v891, %v891
        %v1384 = vpack.c.bf16 %v1075, %v1075
        %v1385 = vpack.c.bf16 %v1129, %v1129
        %v1386 = vpack.c.bf16 %v1077, %v1077
        %v1387 = vpack.c.bf16 %v1131, %v1131
        %v1388 = vpack.c.bf16 %v1079, %v1079
        %v1389 = vpack.c.bf16 %v1133, %v1133
        %v1390 = vpack.c.bf16 %v1081, %v1081
        %v1391 = vpack.c.bf16 %v1135, %v1135
        %v1394 = vunpack.c.l.b16 %v1376
        %v1395 = vunpack.c.l.b16 %v1377
        %v1396 = vpack.c.b16 %v1395, %v1394
        %v1399 = vunpack.c.l.b16 %v1384
        %v1400 = vunpack.c.l.b16 %v1385
        %v1401 = vpack.c.b16 %v1400, %v1399
        %vm1402 = vcmask 130048
        %v1404 = vsel %vm1402, %v1396, 0
        %v1407 = vsel %vm1402, %v1401, 0
        %1409 = vmatpush.bf16.xpose.msra.mxu0 0
        %1410 = vmatpush.bf16.xpose.msra.mxu0 0
        %1411 = vmatpush.bf16.xpose.msra.mxu0 0
        %1412 = vmatpush.bf16.xpose.msra.mxu0 0
        %1413 = vmatpush.bf16.xpose.msra.mxu0 0
        %1414 = vmatpush.bf16.xpose.msra.mxu0 0
        %1415 = vmatpush.bf16.xpose.msra.mxu0 0
        %1416 = vmatpush.bf16.xpose.msra.mxu0 %v1407
        %1417 = vmatmul.bf16.gmra.mxu0 %v1404
        %v1418 = vpop.f32.mrf.mxu0
        %v1419 = vadd.f32 0.0, %v1418
        %v1420 = vpop.f32.mrf.mxu0
        %v1421 = vadd.f32 0.0, %v1420
        %1422 = vdwg.mxu0
        %v1425 = vunpack.c.l.b16 %v1378
        %v1426 = vunpack.c.l.b16 %v1379
        %v1427 = vpack.c.b16 %v1426, %v1425
        %v1430 = vunpack.c.l.b16 %v1386
        %v1431 = vunpack.c.l.b16 %v1387
        %v1432 = vpack.c.b16 %v1431, %v1430
        %v1434 = vsel %vm1402, %v1427, 0
        %v1437 = vsel %vm1402, %v1432, 0
        %1439 = vmatpush.bf16.xpose.msra.mxu0 0
        %1440 = vmatpush.bf16.xpose.msra.mxu0 0
        %1441 = vmatpush.bf16.xpose.msra.mxu0 0
        %1442 = vmatpush.bf16.xpose.msra.mxu0 0
        %1443 = vmatpush.bf16.xpose.msra.mxu0 0
        %1444 = vmatpush.bf16.xpose.msra.mxu0 0
        %1445 = vmatpush.bf16.xpose.msra.mxu0 0
        %1446 = vmatpush.bf16.xpose.msra.mxu0 %v1437
        %1447 = vmatmul.bf16.gmra.mxu0 %v1434
        %v1448 = vpop.f32.mrf.mxu0
        %v1449 = vadd.f32 0.0, %v1448
        %v1450 = vpop.f32.mrf.mxu0
        %v1451 = vadd.f32 0.0, %v1450
        %1452 = vdwg.mxu0
        %v1455 = vunpack.c.l.b16 %v1380
        %v1456 = vunpack.c.l.b16 %v1381
        %v1457 = vpack.c.b16 %v1456, %v1455
        %v1460 = vunpack.c.l.b16 %v1388
        %v1461 = vunpack.c.l.b16 %v1389
        %v1462 = vpack.c.b16 %v1461, %v1460
        %v1464 = vsel %vm1402, %v1457, 0
        %v1467 = vsel %vm1402, %v1462, 0
        %1469 = vmatpush.bf16.xpose.msra.mxu0 0
        %1470 = vmatpush.bf16.xpose.msra.mxu0 0
        %1471 = vmatpush.bf16.xpose.msra.mxu0 0
        %1472 = vmatpush.bf16.xpose.msra.mxu0 0
        %1473 = vmatpush.bf16.xpose.msra.mxu0 0
        %1474 = vmatpush.bf16.xpose.msra.mxu0 0
        %1475 = vmatpush.bf16.xpose.msra.mxu0 0
        %1476 = vmatpush.bf16.xpose.msra.mxu0 %v1467
        %1477 = vmatmul.bf16.gmra.mxu0 %v1464
        %v1478 = vpop.f32.mrf.mxu0
        %v1479 = vadd.f32 0.0, %v1478
        %v1480 = vpop.f32.mrf.mxu0
        %v1481 = vadd.f32 0.0, %v1480
        %1482 = vdwg.mxu0
        %v1485 = vunpack.c.l.b16 %v1382
        %v1486 = vunpack.c.l.b16 %v1383
        %v1487 = vpack.c.b16 %v1486, %v1485
        %v1490 = vunpack.c.l.b16 %v1390
        %v1491 = vunpack.c.l.b16 %v1391
        %v1492 = vpack.c.b16 %v1491, %v1490
        %v1494 = vsel %vm1402, %v1487, 0
        %v1497 = vsel %vm1402, %v1492, 0
        %1499 = vmatpush.bf16.xpose.msra.mxu0 0
        %1500 = vmatpush.bf16.xpose.msra.mxu0 0
        %1501 = vmatpush.bf16.xpose.msra.mxu0 0
        %1502 = vmatpush.bf16.xpose.msra.mxu0 0
        %1503 = vmatpush.bf16.xpose.msra.mxu0 0
        %1504 = vmatpush.bf16.xpose.msra.mxu0 0
        %1505 = vmatpush.bf16.xpose.msra.mxu0 0
        %1506 = vmatpush.bf16.xpose.msra.mxu0 %v1497
        %1507 = vmatmul.bf16.gmra.mxu0 %v1494
        %v1508 = vpop.f32.mrf.mxu0
        %v1509 = vadd.f32 0.0, %v1508
        %v1510 = vpop.f32.mrf.mxu0
        %v1511 = vadd.f32 0.0, %v1510
        %1512 = vdwg.mxu0
        %v1513 = vlaneseq
        %v1514 = vshrl.u32 %v1513, 7
        %v1515 = vadd.s32 %v1514, 8
        %v1516 = vlaneseq
        %v1517 = vand.u32 %v1516, 127
        %vm1518 = vcmp.le.s32.totalorder %v1517, %v1514
        %vm1519 = vcmp.le.s32.totalorder %v1517, %v1515
        %v1520 = vsel %vm1518, 1, 0
        %v1521 = vsel %vm1519, 1, 0
        %vm1522 = vcmp.eq.s32.totalorder %v1520, 1
        %vm1523 = vcmp.eq.s32.totalorder %v1521, 1
        %v1524 = vsel %vm1522, %v1419, -1e+30
        %v1525 = vsel %vm1523, %v1421, -1e+30
        %v1526 = vsel %vm1522, %v1449, -1e+30
        %v1527 = vsel %vm1523, %v1451, -1e+30
        %v1528 = vsel %vm1522, %v1479, -1e+30
        %v1529 = vsel %vm1523, %v1481, -1e+30
        %v1530 = vsel %vm1522, %v1509, -1e+30
        %v1531 = vsel %vm1523, %v1511, -1e+30
        %v1532 = vsel %vm1402, %v1524, -inf
        %1533 = vmax.xlane.f32.xlu0 %v1532
        %v1534 = vpop.xlane.xlu0 %1533
        %v1535 = vsel %vm1402, %v1525, -inf
        %1536 = vmax.xlane.f32.xlu0 %v1535
        %v1537 = vpop.xlane.xlu0 %1536
        %v1538 = vsel %vm1402, %v1526, -inf
        %1539 = vmax.xlane.f32.xlu0 %v1538
        %v1540 = vpop.xlane.xlu0 %1539
        %v1541 = vsel %vm1402, %v1527, -inf
        %1542 = vmax.xlane.f32.xlu0 %v1541
        %v1543 = vpop.xlane.xlu0 %1542
        %v1544 = vsel %vm1402, %v1528, -inf
        %1545 = vmax.xlane.f32.xlu0 %v1544
        %v1546 = vpop.xlane.xlu0 %1545
        %v1547 = vsel %vm1402, %v1529, -inf
        %1548 = vmax.xlane.f32.xlu0 %v1547
        %v1549 = vpop.xlane.xlu0 %1548
        %v1550 = vsel %vm1402, %v1530, -inf
        %1551 = vmax.xlane.f32.xlu0 %v1550
        %v1552 = vpop.xlane.xlu0 %1551
        %v1553 = vsel %vm1402, %v1531, -inf
        %1554 = vmax.xlane.f32.xlu0 %v1553
        %v1555 = vpop.xlane.xlu0 %1554
        %v1556 = vsub.f32 %v1524, %v1534
        %v1557 = vsub.f32 %v1525, %v1537
        %v1558 = vsub.f32 %v1526, %v1540
        %v1559 = vsub.f32 %v1527, %v1543
        %v1560 = vsub.f32 %v1528, %v1546
        %v1561 = vsub.f32 %v1529, %v1549
        %v1562 = vsub.f32 %v1530, %v1552
        %v1563 = vsub.f32 %v1531, %v1555
        %v1564 = vmul.f32 %v1556, 1.442695
        %v1565 = vpow.pop %v1564
        %v1566 = vmul.f32 %v1557, 1.442695
        %v1567 = vpow.pop %v1566
        %v1568 = vmul.f32 %v1558, 1.442695
        %v1569 = vpow.pop %v1568
        %v1570 = vmul.f32 %v1559, 1.442695
        %v1571 = vpow.pop %v1570
        %v1572 = vmul.f32 %v1560, 1.442695
        %v1573 = vpow.pop %v1572
        %v1574 = vmul.f32 %v1561, 1.442695
        %v1575 = vpow.pop %v1574
        %v1576 = vmul.f32 %v1562, 1.442695
        %v1577 = vpow.pop %v1576
        %v1578 = vmul.f32 %v1563, 1.442695
        %v1579 = vpow.pop %v1578
        %v1580 = vsel %vm1402, %v1565, 0.0
        %1581 = vadd.xlane.f32.xlu0 %v1580
        %v1582 = vpop.xlane.xlu0 %1581
        %v1583 = vsel %vm1402, %v1567, 0.0
        %1584 = vadd.xlane.f32.xlu0 %v1583
        %v1585 = vpop.xlane.xlu0 %1584
        %v1586 = vsel %vm1402, %v1569, 0.0
        %1587 = vadd.xlane.f32.xlu0 %v1586
        %v1588 = vpop.xlane.xlu0 %1587
        %v1589 = vsel %vm1402, %v1571, 0.0
        %1590 = vadd.xlane.f32.xlu0 %v1589
        %v1591 = vpop.xlane.xlu0 %1590
        %v1592 = vsel %vm1402, %v1573, 0.0
        %1593 = vadd.xlane.f32.xlu0 %v1592
        %v1594 = vpop.xlane.xlu0 %1593
        %v1595 = vsel %vm1402, %v1575, 0.0
        %1596 = vadd.xlane.f32.xlu0 %v1595
        %v1597 = vpop.xlane.xlu0 %1596
        %v1598 = vsel %vm1402, %v1577, 0.0
        %1599 = vadd.xlane.f32.xlu0 %v1598
        %v1600 = vpop.xlane.xlu0 %1599
        %v1601 = vsel %vm1402, %v1579, 0.0
        %1602 = vadd.xlane.f32.xlu0 %v1601
        %v1603 = vpop.xlane.xlu0 %1602
        %v1604 = vrcp.pop %v1582
        %v1605 = vrcp.pop %v1585
        %v1606 = vrcp.pop %v1588
        %v1607 = vrcp.pop %v1591
        %v1608 = vrcp.pop %v1594
        %v1609 = vrcp.pop %v1597
        %v1610 = vrcp.pop %v1600
        %v1611 = vrcp.pop %v1603
        %v1612 = vmul.f32 %v1565, %v1604
        %v1613 = vmul.f32 %v1567, %v1605
        %v1614 = vmul.f32 %v1569, %v1606
        %v1615 = vmul.f32 %v1571, %v1607
        %v1616 = vmul.f32 %v1573, %v1608
        %v1617 = vmul.f32 %v1575, %v1609
        %v1618 = vmul.f32 %v1577, %v1610
        %v1619 = vmul.f32 %v1579, %v1611
        %v1620 = vpack.c.bf16 %v1612, %v1612
        %v1621 = vpack.c.bf16 %v1613, %v1613
        %v1622 = vpack.c.bf16 %v1614, %v1614
        %v1623 = vpack.c.bf16 %v1615, %v1615
        %v1624 = vpack.c.bf16 %v1616, %v1616
        %v1625 = vpack.c.bf16 %v1617, %v1617
        %v1626 = vpack.c.bf16 %v1618, %v1618
        %v1627 = vpack.c.bf16 %v1619, %v1619
        %v1628 = vpack.c.bf16 %v1315, %v1315
        %v1629 = vpack.c.bf16 %v1369, %v1369
        %v1630 = vpack.c.bf16 %v1317, %v1317
        %v1631 = vpack.c.bf16 %v1371, %v1371
        %v1632 = vpack.c.bf16 %v1319, %v1319
        %v1633 = vpack.c.bf16 %v1373, %v1373
        %v1634 = vpack.c.bf16 %v1321, %v1321
        %v1635 = vpack.c.bf16 %v1375, %v1375
        %v1638 = vunpack.c.l.b16 %v1620
        %v1639 = vunpack.c.l.b16 %v1621
        %v1640 = vpack.c.b16 %v1639, %v1638
        %v1643 = vunpack.c.l.b16 %v1628
        %v1644 = vunpack.c.l.b16 %v1629
        %v1645 = vpack.c.b16 %v1644, %v1643
        %v1648 = vsel %vm1402, %v1640, 0
        %1650 = vmatpush.bf16.msra.mxu0 0
        %1651 = vmatpush.bf16.msra.mxu0 0
        %1652 = vmatpush.bf16.msra.mxu0 0
        %1653 = vmatpush.bf16.msra.mxu0 0
        %1654 = vmatpush.bf16.msra.mxu0 0
        %1655 = vmatpush.bf16.msra.mxu0 0
        %1656 = vmatpush.bf16.msra.mxu0 0
        %1657 = vmatpush.bf16.msra.mxu0 %v1645
        %1658 = vmatmul.bf16.gmra.mxu0 %v1648
        %v1659 = vpop.f32.mrf.mxu0
        %v1660 = vadd.f32 0.0, %v1659
        %v1661 = vpop.f32.mrf.mxu0
        %v1662 = vadd.f32 0.0, %v1661
        %1663 = vdwg.mxu0
        %v1666 = vunpack.c.l.b16 %v1622
        %v1667 = vunpack.c.l.b16 %v1623
        %v1668 = vpack.c.b16 %v1667, %v1666
        %v1671 = vunpack.c.l.b16 %v1630
        %v1672 = vunpack.c.l.b16 %v1631
        %v1673 = vpack.c.b16 %v1672, %v1671
        %v1676 = vsel %vm1402, %v1668, 0
        %1678 = vmatpush.bf16.msra.mxu0 0
        %1679 = vmatpush.bf16.msra.mxu0 0
        %1680 = vmatpush.bf16.msra.mxu0 0
        %1681 = vmatpush.bf16.msra.mxu0 0
        %1682 = vmatpush.bf16.msra.mxu0 0
        %1683 = vmatpush.bf16.msra.mxu0 0
        %1684 = vmatpush.bf16.msra.mxu0 0
        %1685 = vmatpush.bf16.msra.mxu0 %v1673
        %1686 = vmatmul.bf16.gmra.mxu0 %v1676
        %v1687 = vpop.f32.mrf.mxu0
        %v1688 = vadd.f32 0.0, %v1687
        %v1689 = vpop.f32.mrf.mxu0
        %v1690 = vadd.f32 0.0, %v1689
        %1691 = vdwg.mxu0
        %v1694 = vunpack.c.l.b16 %v1624
        %v1695 = vunpack.c.l.b16 %v1625
        %v1696 = vpack.c.b16 %v1695, %v1694
        %v1699 = vunpack.c.l.b16 %v1632
        %v1700 = vunpack.c.l.b16 %v1633
        %v1701 = vpack.c.b16 %v1700, %v1699
        %v1704 = vsel %vm1402, %v1696, 0
        %1706 = vmatpush.bf16.msra.mxu0 0
        %1707 = vmatpush.bf16.msra.mxu0 0
        %1708 = vmatpush.bf16.msra.mxu0 0
        %1709 = vmatpush.bf16.msra.mxu0 0
        %1710 = vmatpush.bf16.msra.mxu0 0
        %1711 = vmatpush.bf16.msra.mxu0 0
        %1712 = vmatpush.bf16.msra.mxu0 0
        %1713 = vmatpush.bf16.msra.mxu0 %v1701
        %1714 = vmatmul.bf16.gmra.mxu0 %v1704
        %v1715 = vpop.f32.mrf.mxu0
        %v1716 = vadd.f32 0.0, %v1715
        %v1717 = vpop.f32.mrf.mxu0
        %v1718 = vadd.f32 0.0, %v1717
        %1719 = vdwg.mxu0
        %v1722 = vunpack.c.l.b16 %v1626
        %v1723 = vunpack.c.l.b16 %v1627
        %v1724 = vpack.c.b16 %v1723, %v1722
        %v1727 = vunpack.c.l.b16 %v1634
        %v1728 = vunpack.c.l.b16 %v1635
        %v1729 = vpack.c.b16 %v1728, %v1727
        %v1732 = vsel %vm1402, %v1724, 0
        %1734 = vmatpush.bf16.msra.mxu0 0
        %1735 = vmatpush.bf16.msra.mxu0 0
        %1736 = vmatpush.bf16.msra.mxu0 0
        %1737 = vmatpush.bf16.msra.mxu0 0
        %1738 = vmatpush.bf16.msra.mxu0 0
        %1739 = vmatpush.bf16.msra.mxu0 0
        %1740 = vmatpush.bf16.msra.mxu0 0
        %1741 = vmatpush.bf16.msra.mxu0 %v1729
        %1742 = vmatmul.bf16.gmra.mxu0 %v1732
        %v1743 = vpop.f32.mrf.mxu0
        %v1744 = vadd.f32 0.0, %v1743
        %v1745 = vpop.f32.mrf.mxu0
        %v1746 = vadd.f32 0.0, %v1745
        %1747 = vdwg.mxu0
        %v1748 = vrot.slane %v1716, 4
        %v1749 = vsel %vm672, %v1748, %v1660
        %v1750 = vrot.slane %v1660, 4
        %v1751 = vsel %vm672, %v1716, %v1750
        %v1753 = vunpack.c.l.s4 1983009808
        %v1754 = vunpack.c.0.s8 %v1753
        %v1755 = vperm.slane %v1749, %v1754
        %v1757 = vunpack.c.l.s4 1983009808
        %v1758 = vunpack.c.0.s8 %v1757
        %v1759 = vperm.slane %v1751, %v1758
        %v1760 = vrot.slane %v1744, 4
        %v1761 = vsel %vm672, %v1760, %v1688
        %v1762 = vrot.slane %v1688, 4
        %v1763 = vsel %vm672, %v1744, %v1762
        %v1765 = vunpack.c.l.s4 1983009808
        %v1766 = vunpack.c.0.s8 %v1765
        %v1767 = vperm.slane %v1761, %v1766
        %v1769 = vunpack.c.l.s4 1983009808
        %v1770 = vunpack.c.0.s8 %v1769
        %v1771 = vperm.slane %v1763, %v1770
        %v1772 = vrot.slane %v1767, 4
        %v1773 = vsel %vm672, %v1772, %v1755
        %v1774 = vrot.slane %v1755, 4
        %v1775 = vsel %vm672, %v1767, %v1774
        %v1777 = vunpack.c.l.s4 1934713408
        %v1778 = vunpack.c.0.s8 %v1777
        %v1779 = vperm.slane %v1773, %v1778
        %v1781 = vunpack.c.l.s4 1934713408
        %v1782 = vunpack.c.0.s8 %v1781
        %v1783 = vperm.slane %v1775, %v1782
        %v1784 = vrot.slane %v1771, 4
        %v1785 = vsel %vm672, %v1784, %v1759
        %v1786 = vrot.slane %v1759, 4
        %v1787 = vsel %vm672, %v1771, %v1786
        %v1789 = vunpack.c.l.s4 1934713408
        %v1790 = vunpack.c.0.s8 %v1789
        %v1791 = vperm.slane %v1785, %v1790
        %v1793 = vunpack.c.l.s4 1934713408
        %v1794 = vunpack.c.0.s8 %v1793
        %v1795 = vperm.slane %v1787, %v1794
        %v1796 = vrot.slane %v1779, 4
        %v1797 = vsel %vm672, 0.0, %v1796
        %v1798 = vrot.slane %v1783, 4
        %v1799 = vsel %vm672, 0.0, %v1798
        %v1800 = vrot.slane %v1791, 4
        %v1801 = vsel %vm672, 0.0, %v1800
        %v1802 = vrot.slane %v1795, 4
        %v1803 = vsel %vm672, 0.0, %v1802
        %v1804 = vrot.slane %v1718, 4
        %v1805 = vsel %vm672, %v1804, %v1662
        %v1806 = vrot.slane %v1662, 4
        %v1807 = vsel %vm672, %v1718, %v1806
        %v1809 = vunpack.c.l.s4 1983009808
        %v1810 = vunpack.c.0.s8 %v1809
        %v1811 = vperm.slane %v1805, %v1810
        %v1813 = vunpack.c.l.s4 1983009808
        %v1814 = vunpack.c.0.s8 %v1813
        %v1815 = vperm.slane %v1807, %v1814
        %v1816 = vrot.slane %v1746, 4
        %v1817 = vsel %vm672, %v1816, %v1690
        %v1818 = vrot.slane %v1690, 4
        %v1819 = vsel %vm672, %v1746, %v1818
        %v1821 = vunpack.c.l.s4 1983009808
        %v1822 = vunpack.c.0.s8 %v1821
        %v1823 = vperm.slane %v1817, %v1822
        %v1825 = vunpack.c.l.s4 1983009808
        %v1826 = vunpack.c.0.s8 %v1825
        %v1827 = vperm.slane %v1819, %v1826
        %v1828 = vrot.slane %v1823, 4
        %v1829 = vsel %vm672, %v1828, %v1811
        %v1830 = vrot.slane %v1811, 4
        %v1831 = vsel %vm672, %v1823, %v1830
        %v1833 = vunpack.c.l.s4 1934713408
        %v1834 = vunpack.c.0.s8 %v1833
        %v1835 = vperm.slane %v1829, %v1834
        %v1837 = vunpack.c.l.s4 1934713408
        %v1838 = vunpack.c.0.s8 %v1837
        %v1839 = vperm.slane %v1831, %v1838
        %v1840 = vrot.slane %v1827, 4
        %v1841 = vsel %vm672, %v1840, %v1815
        %v1842 = vrot.slane %v1815, 4
        %v1843 = vsel %vm672, %v1827, %v1842
        %v1845 = vunpack.c.l.s4 1934713408
        %v1846 = vunpack.c.0.s8 %v1845
        %v1847 = vperm.slane %v1841, %v1846
        %v1849 = vunpack.c.l.s4 1934713408
        %v1850 = vunpack.c.0.s8 %v1849
        %v1851 = vperm.slane %v1843, %v1850
        %v1852 = vrot.slane %v1835, 4
        %v1853 = vsel %vm672, 0.0, %v1852
        %v1854 = vrot.slane %v1839, 4
        %v1855 = vsel %vm672, 0.0, %v1854
        %v1856 = vrot.slane %v1847, 4
        %v1857 = vsel %vm672, 0.0, %v1856
        %v1858 = vrot.slane %v1851, 4
        %v1859 = vsel %vm672, 0.0, %v1858
        %v1860 = vsel %vm672, %v1798, %v1779
        %v1862 = vunpack.c.l.s4 1983009808
        %v1863 = vunpack.c.0.s8 %v1862
        %v1864 = vperm.slane %v1860, %v1863
        %v1865 = vrot.slane %v1799, 4
        %v1866 = vsel %vm672, %v1865, %v1797
        %v1868 = vunpack.c.l.s4 1983009808
        %v1869 = vunpack.c.0.s8 %v1868
        %v1870 = vperm.slane %v1866, %v1869
        %v1871 = vsel %vm672, %v1802, %v1791
        %v1873 = vunpack.c.l.s4 1983009808
        %v1874 = vunpack.c.0.s8 %v1873
        %v1875 = vperm.slane %v1871, %v1874
        %v1876 = vrot.slane %v1803, 4
        %v1877 = vsel %vm672, %v1876, %v1801
        %v1879 = vunpack.c.l.s4 1983009808
        %v1880 = vunpack.c.0.s8 %v1879
        %v1881 = vperm.slane %v1877, %v1880
        %v1882 = vrot.slane %v1870, 4
        %v1883 = vsel %vm672, %v1882, %v1864
        %v1884 = vrot.slane %v1864, 4
        %v1885 = vsel %vm672, %v1870, %v1884
        %v1887 = vunpack.c.l.s4 1934713408
        %v1888 = vunpack.c.0.s8 %v1887
        %v1889 = vperm.slane %v1883, %v1888
        %v1891 = vunpack.c.l.s4 1934713408
        %v1892 = vunpack.c.0.s8 %v1891
        %v1893 = vperm.slane %v1885, %v1892
        %v1894 = vrot.slane %v1881, 4
        %v1895 = vsel %vm672, %v1894, %v1875
        %v1896 = vrot.slane %v1875, 4
        %v1897 = vsel %vm672, %v1881, %v1896
        %v1899 = vunpack.c.l.s4 1934713408
        %v1900 = vunpack.c.0.s8 %v1899
        %v1901 = vperm.slane %v1895, %v1900
        %v1903 = vunpack.c.l.s4 1934713408
        %v1904 = vunpack.c.0.s8 %v1903
        %v1905 = vperm.slane %v1897, %v1904
        %v1906 = vrot.slane %v1901, 4
        %v1907 = vsel %vm672, %v1906, %v1889
        %v1908 = vrot.slane %v1889, 4
        %v1909 = vsel %vm672, %v1901, %v1908
        %v1910 = vrot.slane %v1905, 4
        %v1911 = vsel %vm672, %v1910, %v1893
        %v1912 = vrot.slane %v1893, 4
        %v1913 = vsel %vm672, %v1905, %v1912
        %v1914 = vsel %vm672, %v1854, %v1835
        %v1916 = vunpack.c.l.s4 1983009808
        %v1917 = vunpack.c.0.s8 %v1916
        %v1918 = vperm.slane %v1914, %v1917
        %v1919 = vrot.slane %v1855, 4
        %v1920 = vsel %vm672, %v1919, %v1853
        %v1922 = vunpack.c.l.s4 1983009808
        %v1923 = vunpack.c.0.s8 %v1922
        %v1924 = vperm.slane %v1920, %v1923
        %v1925 = vsel %vm672, %v1858, %v1847
        %v1927 = vunpack.c.l.s4 1983009808
        %v1928 = vunpack.c.0.s8 %v1927
        %v1929 = vperm.slane %v1925, %v1928
        %v1930 = vrot.slane %v1859, 4
        %v1931 = vsel %vm672, %v1930, %v1857
        %v1933 = vunpack.c.l.s4 1983009808
        %v1934 = vunpack.c.0.s8 %v1933
        %v1935 = vperm.slane %v1931, %v1934
        %v1936 = vrot.slane %v1924, 4
        %v1937 = vsel %vm672, %v1936, %v1918
        %v1938 = vrot.slane %v1918, 4
        %v1939 = vsel %vm672, %v1924, %v1938
        %v1941 = vunpack.c.l.s4 1934713408
        %v1942 = vunpack.c.0.s8 %v1941
        %v1943 = vperm.slane %v1937, %v1942
        %v1945 = vunpack.c.l.s4 1934713408
        %v1946 = vunpack.c.0.s8 %v1945
        %v1947 = vperm.slane %v1939, %v1946
        %v1948 = vrot.slane %v1935, 4
        %v1949 = vsel %vm672, %v1948, %v1929
        %v1950 = vrot.slane %v1929, 4
        %v1951 = vsel %vm672, %v1935, %v1950
        %v1953 = vunpack.c.l.s4 1934713408
        %v1954 = vunpack.c.0.s8 %v1953
        %v1955 = vperm.slane %v1949, %v1954
        %v1957 = vunpack.c.l.s4 1934713408
        %v1958 = vunpack.c.0.s8 %v1957
        %v1959 = vperm.slane %v1951, %v1958
        %v1960 = vrot.slane %v1955, 4
        %v1961 = vsel %vm672, %v1960, %v1943
        %v1962 = vrot.slane %v1943, 4
        %v1963 = vsel %vm672, %v1955, %v1962
        %v1964 = vrot.slane %v1959, 4
        %v1965 = vsel %vm672, %v1964, %v1947
        %v1966 = vrot.slane %v1947, 4
        %v1967 = vsel %vm672, %v1959, %v1966
        %1970 = vrot.lane.b32.xlu0 %v1909, 16
        %v1971 = vpop.permute.xlu0 %1970
        %1972 = vrot.lane.b32.xlu0 %v1963, 16
        %v1973 = vpop.permute.xlu0 %1972
        %1978 = vrot.lane.b32.xlu0 %v1911, 32
        %v1979 = vpop.permute.xlu0 %1978
        %1980 = vrot.lane.b32.xlu0 %v1965, 32
        %v1981 = vpop.permute.xlu0 %1980
        %1986 = vrot.lane.b32.xlu0 %v1913, 48
        %v1987 = vpop.permute.xlu0 %1986
        %1988 = vrot.lane.b32.xlu0 %v1967, 48
        %v1989 = vpop.permute.xlu0 %1988
        %v1992 = vsel %vm1402, %v1907, %v1971
        %v1993 = vsel %vm1402, %v1961, %v1973
        %vm1994 = vcmask 261120
        %v1995 = vsel %vm1994, %v1992, %v1979
        %v1996 = vsel %vm1994, %v1993, %v1981
        %vm1997 = vcmask 392192
        %v1998 = vsel %vm1997, %v1995, %v1987
        %v1999 = vsel %vm1997, %v1996, %v1989
        %v2000 = vld [vmem:[%s5] sm:$0xf]
        %v2001 = vld [vmem:[%s5 + $0x4] sm:$0xf]
        %v2002 = vld [vmem:[%s5 + $0x8] sm:$0xf]
        %v2003 = vld [vmem:[%s5 + $0xc] sm:$0xf]
        %v2004 = vld [vmem:[%s5 + $0x10] sm:$0xf]
        %v2005 = vld [vmem:[%s5 + $0x14] sm:$0xf]
        %v2006 = vld [vmem:[%s5 + $0x18] sm:$0xf]
        %v2007 = vld [vmem:[%s5 + $0x1c] sm:$0xf]
        %v2008 = vpack.c.bf16 %v1999, %v1998
        %v2017 = vunpack.c.l.b16 %v2000
        %v2018 = vunpack.c.l.b16 %v2001
        %v2019 = vunpack.c.l.b16 %v2002
        %v2020 = vunpack.c.l.b16 %v2003
        %v2021 = vunpack.c.l.b16 %v2004
        %v2022 = vunpack.c.l.b16 %v2005
        %v2023 = vunpack.c.l.b16 %v2006
        %v2024 = vunpack.c.l.b16 %v2007
        %v2025 = vpack.c.b16 %v2018, %v2017
        %v2026 = vpack.c.b16 %v2020, %v2019
        %v2027 = vpack.c.b16 %v2022, %v2021
        %v2028 = vpack.c.b16 %v2024, %v2023
        %v2034 = vsel %vm503, %v2008, 0
        %2036 = vmatpush.bf16.msra.mxu0 0
        %2037 = vmatpush.bf16.msra.mxu0 0
        %2038 = vmatpush.bf16.msra.mxu0 0
        %2039 = vmatpush.bf16.msra.mxu0 0
        %2040 = vmatpush.bf16.msra.mxu0 %v2028
        %2041 = vmatpush.bf16.msra.mxu0 %v2027
        %2042 = vmatpush.bf16.msra.mxu0 %v2026
        %2043 = vmatpush.bf16.msra.mxu0 %v2025
        %2044 = vmatmul.bf16.gmra.mxu0 %v2034
        %v2045 = vpop.f32.mrf.mxu0
        %v2046 = vadd.f32 0.0, %v2045
        %v2047 = vpop.f32.mrf.mxu0
        %v2048 = vadd.f32 0.0, %v2047
        %2049 = vdwg.mxu0
        %v2050 = vadd.f32 %v499, %v2046
        %v2051 = vadd.f32 %v500, %v2048
        %v2052 = vld [vmem:[%s6] sm:$0x1]
        %v2054 = vperm.slane %v2052, 0
        %v2056 = vadd.f32 %v2050, %v2054
        %v2057 = vadd.f32 %v2051, %v2054
        %v2058 = vld [vmem:[#allocation7] sm:$0x1]
        %v2059 = vld [vmem:[#allocation8] sm:$0x1]
        %v2060 = vsel %vm503, %v2056, 0.0
        %2061 = vadd.xlane.f32.xlu0 %v2060
        %v2062 = vpop.xlane.xlu0 %2061
        %v2063 = vsel %vm503, %v2057, 0.0
        %2064 = vadd.xlane.f32.xlu0 %v2063
        %v2065 = vpop.xlane.xlu0 %2064
        %v2066 = vmul.f32 %v2062, %v516
        %v2067 = vmul.f32 %v2065, %v516
        %v2068 = vsub.f32 %v2056, %v2066
        %v2069 = vsub.f32 %v2057, %v2067
        %v2070 = vmul.f32 %v2068, %v2068
        %v2071 = vmul.f32 %v2069, %v2069
        %v2072 = vsel %vm503, %v2070, 0.0
        %2073 = vadd.xlane.f32.xlu0 %v2072
        %v2074 = vpop.xlane.xlu0 %2073
        %v2075 = vsel %vm503, %v2071, 0.0
        %2076 = vadd.xlane.f32.xlu0 %v2075
        %v2077 = vpop.xlane.xlu0 %2076
        %v2078 = vmul.f32 %v2074, %v516
        %v2079 = vmul.f32 %v2077, %v516
        %v2080 = vadd.f32 %v2078, 1e-05
        %v2081 = vadd.f32 %v2079, 1e-05
        %v2082 = vrsqrt.pop %v2080
        %v2083 = vmul.f32 %v2082, %v2080
        %v2084 = vmul.f32 %v2083, %v2082
        %v2085 = vmul.f32 0.5, %v2084
        %v2086 = vsub.f32 1.5, %v2085
        %v2087 = vmul.f32 %v2082, %v2086
        %vm2088 = vweird.f32 %v2080
        %vm2089 = vweird.f32 %v2082
        %vm2090 = vmor %vm2088, %vm2089
        %v2091 = vsel %vm2090, %v2082, %v2087
        %v2092 = vrsqrt.pop %v2081
        %v2093 = vmul.f32 %v2092, %v2081
        %v2094 = vmul.f32 %v2093, %v2092
        %v2095 = vmul.f32 0.5, %v2094
        %v2096 = vsub.f32 1.5, %v2095
        %v2097 = vmul.f32 %v2092, %v2096
        %vm2098 = vweird.f32 %v2081
        %vm2099 = vweird.f32 %v2092
        %vm2100 = vmor %vm2098, %vm2099
        %v2101 = vsel %vm2100, %v2092, %v2097
        %v2102 = vmul.f32 %v2068, %v2091
        %v2103 = vmul.f32 %v2069, %v2101
        %v2105 = vperm.slane %v2058, 0
        %v2107 = vmul.f32 %v2102, %v2105
        %v2108 = vmul.f32 %v2103, %v2105
        %v2110 = vperm.slane %v2059, 0
        %v2112 = vadd.f32 %v2107, %v2110
        %v2113 = vadd.f32 %v2108, %v2110
        %v2114 = vld [vmem:[%s9] sm:$0xff]
        %v2115 = vld [vmem:[%s9 + $0x8] sm:$0xff]
        %v2116 = vld [vmem:[%s9 + $0x10] sm:$0xff]
        %v2117 = vld [vmem:[%s9 + $0x18] sm:$0xff]
        %v2118 = vld [vmem:[%s9 + $0x20] sm:$0xff]
        %v2119 = vld [vmem:[%s9 + $0x28] sm:$0xff]
        %v2120 = vld [vmem:[%s9 + $0x30] sm:$0xff]
        %v2121 = vld [vmem:[%s9 + $0x38] sm:$0xff]
        %v2122 = vpack.c.bf16 %v2113, %v2112
        %v2123 = vld [vmem:[%s10] sm:$0x3]
        %v2125 = vperm.slane %v2123, 0
        %v2126 = vperm.slane %v2123, 1
        %v2137 = vunpack.c.l.b16 %v2114
        %v2138 = vunpack.c.h.b16 %v2114
        %v2139 = vunpack.c.l.b16 %v2115
        %v2140 = vunpack.c.h.b16 %v2115
        %v2141 = vunpack.c.l.b16 %v2116
        %v2142 = vunpack.c.h.b16 %v2116
        %v2143 = vunpack.c.l.b16 %v2117
        %v2144 = vunpack.c.h.b16 %v2117
        %v2145 = vunpack.c.l.b16 %v2118
        %v2146 = vunpack.c.h.b16 %v2118
        %v2147 = vunpack.c.l.b16 %v2119
        %v2148 = vunpack.c.h.b16 %v2119
        %v2149 = vunpack.c.l.b16 %v2120
        %v2150 = vunpack.c.h.b16 %v2120
        %v2151 = vunpack.c.l.b16 %v2121
        %v2152 = vunpack.c.h.b16 %v2121
        %v2153 = vpack.c.b16 %v2139, %v2137
        %v2154 = vpack.c.b16 %v2140, %v2138
        %v2155 = vpack.c.b16 %v2143, %v2141
        %v2156 = vpack.c.b16 %v2144, %v2142
        %v2157 = vpack.c.b16 %v2147, %v2145
        %v2158 = vpack.c.b16 %v2148, %v2146
        %v2159 = vpack.c.b16 %v2151, %v2149
        %v2160 = vpack.c.b16 %v2152, %v2150
        %v2170 = vsel %vm503, %v2122, 0
        %2172 = vmatpush.bf16.msra.mxu0 0
        %2173 = vmatpush.bf16.msra.mxu0 0
        %2174 = vmatpush.bf16.msra.mxu0 0
        %2175 = vmatpush.bf16.msra.mxu0 0
        %2176 = vmatpush.bf16.msra.mxu0 %v2159
        %2177 = vmatpush.bf16.msra.mxu0 %v2157
        %2178 = vmatpush.bf16.msra.mxu0 %v2155
        %2179 = vmatpush.bf16.msra.mxu0 %v2153
        %2180 = vmatmul.bf16.gmra.mxu0 %v2170
        %v2181 = vpop.f32.mrf.mxu0
        %v2182 = vadd.f32 %v2125, %v2181
        %v2183 = vpop.f32.mrf.mxu0
        %v2184 = vadd.f32 %v2125, %v2183
        %2185 = vdwg.mxu0
        %2186 = vmatpush.bf16.msra.mxu0 0
        %2187 = vmatpush.bf16.msra.mxu0 0
        %2188 = vmatpush.bf16.msra.mxu0 0
        %2189 = vmatpush.bf16.msra.mxu0 0
        %2190 = vmatpush.bf16.msra.mxu0 %v2160
        %2191 = vmatpush.bf16.msra.mxu0 %v2158
        %2192 = vmatpush.bf16.msra.mxu0 %v2156
        %2193 = vmatpush.bf16.msra.mxu0 %v2154
        %2194 = vmatmul.bf16.gmra.mxu0 %v2170
        %v2195 = vpop.f32.mrf.mxu0
        %v2196 = vadd.f32 %v2126, %v2195
        %v2197 = vpop.f32.mrf.mxu0
        %v2198 = vadd.f32 %v2126, %v2197
        %2199 = vdwg.mxu0
        %v2200 = vmul.f32 %v2182, 0.5
        %v2201 = vmul.f32 %v2196, 0.5
        %v2202 = vmul.f32 %v2184, 0.5
        %v2203 = vmul.f32 %v2198, 0.5
        %v2204 = vmul.f32 %v2182, 0.044715
        %v2205 = vmul.f32 %v2196, 0.044715
        %v2206 = vmul.f32 %v2184, 0.044715
        %v2207 = vmul.f32 %v2198, 0.044715
        %v2208 = vmul.f32 %v2204, %v2182
        %v2209 = vmul.f32 %v2205, %v2196
        %v2210 = vmul.f32 %v2206, %v2184
        %v2211 = vmul.f32 %v2207, %v2198
        %v2212 = vmul.f32 %v2208, %v2182
        %v2213 = vmul.f32 %v2209, %v2196
        %v2214 = vmul.f32 %v2210, %v2184
        %v2215 = vmul.f32 %v2211, %v2198
        %v2216 = vadd.f32 %v2182, %v2212
        %v2217 = vadd.f32 %v2196, %v2213
        %v2218 = vadd.f32 %v2184, %v2214
        %v2219 = vadd.f32 %v2198, %v2215
        %v2220 = vmul.f32 %v2216, 0.7978846
        %v2221 = vmul.f32 %v2217, 0.7978846
        %v2222 = vmul.f32 %v2218, 0.7978846
        %v2223 = vmul.f32 %v2219, 0.7978846
        %v2224 = vtanh.pop %v2220
        %v2225 = vtanh.pop %v2221
        %v2226 = vtanh.pop %v2222
        %v2227 = vtanh.pop %v2223
        %v2228 = vadd.f32 %v2224, 1.0
        %v2229 = vadd.f32 %v2225, 1.0
        %v2230 = vadd.f32 %v2226, 1.0
        %v2231 = vadd.f32 %v2227, 1.0
        %v2232 = vmul.f32 %v2200, %v2228
        %v2233 = vmul.f32 %v2201, %v2229
        %v2234 = vmul.f32 %v2202, %v2230
        %v2235 = vmul.f32 %v2203, %v2231
        %v2236 = vld [vmem:[%s11] sm:$0xf]
        %v2237 = vld [vmem:[%s11 + $0x4] sm:$0xf]
        %v2238 = vld [vmem:[%s11 + $0x8] sm:$0xf]
        %v2239 = vld [vmem:[%s11 + $0xc] sm:$0xf]
        %v2240 = vld [vmem:[%s11 + $0x10] sm:$0xf]
        %v2241 = vld [vmem:[%s11 + $0x14] sm:$0xf]
        %v2242 = vld [vmem:[%s11 + $0x18] sm:$0xf]
        %v2243 = vld [vmem:[%s11 + $0x1c] sm:$0xf]
        %v2244 = vld [vmem:[%s11 + $0x20] sm:$0xf]
        %v2245 = vld [vmem:[%s11 + $0x24] sm:$0xf]
        %v2246 = vld [vmem:[%s11 + $0x28] sm:$0xf]
        %v2247 = vld [vmem:[%s11 + $0x2c] sm:$0xf]
        %v2248 = vld [vmem:[%s11 + $0x30] sm:$0xf]
        %v2249 = vld [vmem:[%s11 + $0x34] sm:$0xf]
        %v2250 = vld [vmem:[%s11 + $0x38] sm:$0xf]
        %v2251 = vld [vmem:[%s11 + $0x3c] sm:$0xf]
        %v2252 = vld [vmem:[%s11 + $0x40] sm:$0xf]
        %v2253 = vld [vmem:[%s11 + $0x44] sm:$0xf]
        %v2254 = vld [vmem:[%s11 + $0x48] sm:$0xf]
        %v2255 = vld [vmem:[%s11 + $0x4c] sm:$0xf]
        %v2256 = vld [vmem:[%s11 + $0x50] sm:$0xf]
        %v2257 = vld [vmem:[%s11 + $0x54] sm:$0xf]
        %v2258 = vld [vmem:[%s11 + $0x58] sm:$0xf]
        %v2259 = vld [vmem:[%s11 + $0x5c] sm:$0xf]
        %v2260 = vld [vmem:[%s11 + $0x60] sm:$0xf]
        %v2261 = vld [vmem:[%s11 + $0x64] sm:$0xf]
        %v2262 = vld [vmem:[%s11 + $0x68] sm:$0xf]
        %v2263 = vld [vmem:[%s11 + $0x6c] sm:$0xf]
        %v2264 = vld [vmem:[%s11 + $0x70] sm:$0xf]
        %v2265 = vld [vmem:[%s11 + $0x74] sm:$0xf]
        %v2266 = vld [vmem:[%s11 + $0x78] sm:$0xf]
        %v2267 = vld [vmem:[%s11 + $0x7c] sm:$0xf]
        %v2268 = vpack.c.bf16 %v2234, %v2232
        %v2269 = vpack.c.bf16 %v2235, %v2233
        %v2302 = vunpack.c.l.b16 %v2236
        %v2303 = vunpack.c.l.b16 %v2237
        %v2304 = vunpack.c.l.b16 %v2238
        %v2305 = vunpack.c.l.b16 %v2239
        %v2306 = vunpack.c.l.b16 %v2240
        %v2307 = vunpack.c.l.b16 %v2241
        %v2308 = vunpack.c.l.b16 %v2242
        %v2309 = vunpack.c.l.b16 %v2243
        %v2310 = vunpack.c.l.b16 %v2244
        %v2311 = vunpack.c.l.b16 %v2245
        %v2312 = vunpack.c.l.b16 %v2246
        %v2313 = vunpack.c.l.b16 %v2247
        %v2314 = vunpack.c.l.b16 %v2248
        %v2315 = vunpack.c.l.b16 %v2249
        %v2316 = vunpack.c.l.b16 %v2250
        %v2317 = vunpack.c.l.b16 %v2251
        %v2318 = vunpack.c.l.b16 %v2252
        %v2319 = vunpack.c.l.b16 %v2253
        %v2320 = vunpack.c.l.b16 %v2254
        %v2321 = vunpack.c.l.b16 %v2255
        %v2322 = vunpack.c.l.b16 %v2256
        %v2323 = vunpack.c.l.b16 %v2257
        %v2324 = vunpack.c.l.b16 %v2258
        %v2325 = vunpack.c.l.b16 %v2259
        %v2326 = vunpack.c.l.b16 %v2260
        %v2327 = vunpack.c.l.b16 %v2261
        %v2328 = vunpack.c.l.b16 %v2262
        %v2329 = vunpack.c.l.b16 %v2263
        %v2330 = vunpack.c.l.b16 %v2264
        %v2331 = vunpack.c.l.b16 %v2265
        %v2332 = vunpack.c.l.b16 %v2266
        %v2333 = vunpack.c.l.b16 %v2267
        %v2334 = vpack.c.b16 %v2303, %v2302
        %v2335 = vpack.c.b16 %v2305, %v2304
        %v2336 = vpack.c.b16 %v2307, %v2306
        %v2337 = vpack.c.b16 %v2309, %v2308
        %v2338 = vpack.c.b16 %v2311, %v2310
        %v2339 = vpack.c.b16 %v2313, %v2312
        %v2340 = vpack.c.b16 %v2315, %v2314
        %v2341 = vpack.c.b16 %v2317, %v2316
        %v2342 = vpack.c.b16 %v2319, %v2318
        %v2343 = vpack.c.b16 %v2321, %v2320
        %v2344 = vpack.c.b16 %v2323, %v2322
        %v2345 = vpack.c.b16 %v2325, %v2324
        %v2346 = vpack.c.b16 %v2327, %v2326
        %v2347 = vpack.c.b16 %v2329, %v2328
        %v2348 = vpack.c.b16 %v2331, %v2330
        %v2349 = vpack.c.b16 %v2333, %v2332
        %2366 = vmatpush.bf16.msra.mxu0 %v2341
        %2367 = vmatpush.bf16.msra.mxu0 %v2340
        %2368 = vmatpush.bf16.msra.mxu0 %v2339
        %2369 = vmatpush.bf16.msra.mxu0 %v2338
        %2370 = vmatpush.bf16.msra.mxu0 %v2337
        %2371 = vmatpush.bf16.msra.mxu0 %v2336
        %2372 = vmatpush.bf16.msra.mxu0 %v2335
        %2373 = vmatpush.bf16.msra.mxu0 %v2334
        %2374 = vmatmul.bf16.gmra.mxu0 %v2268
        %v2375 = vpop.f32.mrf.mxu0
        %v2376 = vadd.f32 0.0, %v2375
        %v2377 = vpop.f32.mrf.mxu0
        %v2378 = vadd.f32 0.0, %v2377
        %2379 = vdwg.mxu0
        %2380 = vmatpush.bf16.msra.mxu0 %v2349
        %2381 = vmatpush.bf16.msra.mxu0 %v2348
        %2382 = vmatpush.bf16.msra.mxu0 %v2347
        %2383 = vmatpush.bf16.msra.mxu0 %v2346
        %2384 = vmatpush.bf16.msra.mxu0 %v2345
        %2385 = vmatpush.bf16.msra.mxu0 %v2344
        %2386 = vmatpush.bf16.msra.mxu0 %v2343
        %2387 = vmatpush.bf16.msra.mxu0 %v2342
        %2388 = vmatmul.bf16.gmra.mxu0 %v2269
        %v2389 = vpop.f32.mrf.mxu0
        %v2390 = vadd.f32 %v2376, %v2389
        %v2391 = vpop.f32.mrf.mxu0
        %v2392 = vadd.f32 %v2378, %v2391
        %2393 = vdwg.mxu0
        %v2394 = vadd.f32 %v2056, %v2390
        %v2395 = vadd.f32 %v2057, %v2392
        %v2396 = vld [vmem:[%s12] sm:$0x1]
        %v2398 = vperm.slane %v2396, 0
        %v2400 = vadd.f32 %v2394, %v2398
        %v2401 = vadd.f32 %v2395, %v2398
        %v2402 = vsel %vm503, %v2400, 0.0
        %v2403 = vsel %vm503, %v2401, 0.0
        %2404 = vst [vmem:[%s492] sm:$0xff] %v2402
        %2405 = vst [vmem:[%s492 + $0x8] sm:$0xff] %v2403
        %s2406 = sand.u32 %s316, 1
        %s2407 = scalar_lea.sflag [#allocation4], %s2406
        %s2408 = sand.u32 %s316, 1
        %s2409 = smul.addr %s2408, 16
        %s2410 = scalar_lea.vmem [#allocation10], %s2409
        // Predicated region
        $region89: #{tpu_custom_call.1} parent=71 // pred_check
          %p2411 = pneg %p326
        $region90: #{tpu_custom_call.1} parent=71 // pred_check_branch
          %2413 = sbr.rel (%p2411) target = $region92
        $region91: #{tpu_custom_call.1} parent=71 // pred_region
          %2415 = vsyncadd %s2407, 0
          %s2416 = smul.addr %s30, 2
          %s2417 = smul.addr %s2416, 8
          %s2418 = scalar_lea.hbm %s13, %s2417
          %s2419 = sshll.u32 %s2410, 4
          %s2420 = int_to_ptr.vmem [resolvable:$true] %s2419
          %s2421 = sshll.u32 %s2418, 4
          %s2422 = int_to_ptr.hbm [resolvable:$true] %s2421
          %2427 = dma.vmem_to_hbm [thread:$0]  %s2420, 256, %s2422, %s2407, 128, 128, 8
        $region92: #{tpu_custom_call.1} parent=71 // pred_fallthru
          _
      $region72: #{tpu_custom_call.1} parent=5 // pred_fallthru
        _
      %p2428 = scmp.le.s32.totalorder 2, %s25
      // Predicated region
      $region93: #{tpu_custom_call.1} parent=5 // pred_check
        %p2429 = pneg %p2428
      $region94: #{tpu_custom_call.1} parent=5 // pred_check_branch
        %2431 = sbr.rel (%p2429) target = $region96
      $region95: #{tpu_custom_call.1} parent=5 // pred_region
        %s2432 = ssub.s32 %s25, 2
        // Predicated region
        $region97: #{tpu_custom_call.1} parent=95 // pred_check
          %p2433 = pneg %p332
        $region98: #{tpu_custom_call.1} parent=95 // pred_check_branch
          %2435 = sbr.rel (%p2433) target = $region100
        $region99: #{tpu_custom_call.1} parent=95 // pred_region
          %s2436 = sand.u32 %s317, 1
          %s2437 = scalar_lea.sflag [#allocation4], %s2436
          %s2438 = sand.u32 %s317, 1
          %s2439 = smul.addr %s2438, 16
          %s2440 = scalar_lea.vmem [#allocation10], %s2439
          %2442 = dma.done %s2437, 256
        $region100: #{tpu_custom_call.1} parent=95 // pred_fallthru
          _
      $region96: #{tpu_custom_call.1} parent=5 // pred_fallthru
        _
    $region6: #{tpu_custom_call.1} parent=1 // loop_footer
      %s29 = sadd.s32 1, %s25
    $region7: #{tpu_custom_call.1} parent=1 // loop_footer_branch
      %24 = sbr.rel target = $region3
    $region8: #{tpu_custom_call.1} parent=1 // loop_exit
      _
    %2443 = vsyncpa [#allocation3], 1
    %s2444 = scalar_lea.sflag [#allocation3], 1
    %2445 = vsyncpa %s2444, 1
    %2446 = vsyncpa [#allocation6], 1
    %2447 = vsyncpa [#allocation9], 1
    %2448 = vsyncpa [#allocation4], 1
    %s2449 = scalar_lea.sflag [#allocation4], 1
    %2450 = vsyncpa %s2449, 1

</llo_original>
